<compile_context>
chip_gen: v7x
topology: tpu7x:2x2x1
jax: 0.10.0
libtpu: 0.0.40
codegen_flags: <defaults>
</compile_context>

<pallas_src>
import functools

import jax
import jax.numpy as jnp
from jax.experimental import pallas as pl
from jax.experimental.pallas import tpu as pltpu


def _round_up(n, m):
    return ((n + m - 1) // m) * m


def _lora_qkv_kernel(x_ref, wq_ref, wk_ref, wv_ref, apack_ref, bqv_ref, bias_ref,
                     out_ref, *, dim):
    # x_ref:     (tm, C)        token tile (compute dtype, e.g. bf16)
    # wq/wk/wv:  (C, C)         W_q^T / W_k^T / W_v^T (compute dtype, grid-invariant)
    # apack_ref: (C, rpack)     [A_q^T | A_v^T | 0] packed into one 128-aligned lane block
    # bqv_ref:   (rpack, 2C)    block-structured [B_q^T (rows 0..r-1, cols :C) ;
    #                                             B_v^T (rows r..2r-1, cols C:)]
    # bias_ref:  (1, 3C)        qkv bias (f32)
    # out_ref:   (tm, 3C)
    x = x_ref[...]
    bias = bias_ref[...]

    # One MXU pass produces both rank-r LoRA activations: cols 0..r-1 -> q, r..2r-1 -> v.
    a_proj = jnp.dot(x, apack_ref[...],
                     preferred_element_type=jnp.float32).astype(x.dtype)   # (tm, rpack)

    # ---- q chunk (LoRA added) -------------------------------------------------------
    q = jnp.dot(x, wq_ref[...], preferred_element_type=jnp.float32)
    q += jnp.dot(a_proj, bqv_ref[:, :dim], preferred_element_type=jnp.float32)
    out_ref[:, :dim] = (q + bias[:, :dim]).astype(out_ref.dtype)

    # ---- k chunk (plain linear) -----------------------------------------------------
    k = jnp.dot(x, wk_ref[...], preferred_element_type=jnp.float32)
    out_ref[:, dim:2 * dim] = (k + bias[:, dim:2 * dim]).astype(out_ref.dtype)

    # ---- v chunk (LoRA added) -------------------------------------------------------
    v = jnp.dot(x, wv_ref[...], preferred_element_type=jnp.float32)
    v += jnp.dot(a_proj, bqv_ref[:, dim:], preferred_element_type=jnp.float32)
    out_ref[:, 2 * dim:] = (v + bias[:, 2 * dim:]).astype(out_ref.dtype)


def prepare_lora_qkv_weights(w_qkv, b_qkv, a_q, b_q, a_v, b_v,
                             compute_dtype=jnp.bfloat16):
    """One-time weight prep (transpose / split / pack / cast).

    Takes PyTorch-convention (out_features, in_features) weights; returns kernel-ready
    params. Call once at weight-load time (constant-folds under jit), not per forward.
    """
    dim = w_qkv.shape[1]
    r = a_q.shape[0]
    # Pack BOTH rank-r LoRA-A blocks into one lane-aligned group (2r <= 128 for SAM ranks).
    rpack = _round_up(max(2 * r, 1), 128)

    wqkv_t = w_qkv.T.astype(compute_dtype)          # (C, 3C)
    wq_t = wqkv_t[:, :dim]                          # (C, C)
    wk_t = wqkv_t[:, dim:2 * dim]                   # (C, C)
    wv_t = wqkv_t[:, 2 * dim:]                      # (C, C)

    # A packed: cols 0..r-1 = A_q^T, cols r..2r-1 = A_v^T, rest zero.
    a_pack = jnp.zeros((dim, rpack), dtype=compute_dtype)
    a_pack = a_pack.at[:, :r].set(a_q.T.astype(compute_dtype))
    a_pack = a_pack.at[:, r:2 * r].set(a_v.T.astype(compute_dtype))

    # B combined, block structured so a_proj @ bqv[:, :C] = new_q and a_proj @ bqv[:, C:] = new_v.
    bqv = jnp.zeros((rpack, 2 * dim), dtype=compute_dtype)
    bqv = bqv.at[:r, :dim].set(b_q.T.astype(compute_dtype))
    bqv = bqv.at[r:2 * r, dim:].set(b_v.T.astype(compute_dtype))

    bias2 = b_qkv.reshape(1, 3 * dim).astype(jnp.float32)

    return dict(wq=wq_t, wk=wk_t, wv=wv_t, a_pack=a_pack, bqv=bqv, bias=bias2,
                dim=dim, rpack=rpack, compute_dtype=compute_dtype)


def _vmem_limit_bytes():
    """Scoped-VMEM limit with margin below physical capacity (v7x has only 64 MiB/TC)."""
    try:
        cap = pltpu.get_tpu_info().vmem_capacity_bytes
    except Exception:
        cap = 128 * 1024 * 1024
    return int(min(cap - 16 * 1024 * 1024, 100 * 1024 * 1024))


def lora_qkv_apply(x, params, *, tm=512, out_dtype=None):
    """x: (B, H, W, C); params from prepare_lora_qkv_weights. Returns (B, H, W, 3C)."""
    B, H, W, C = x.shape
    dim, rpack = params["dim"], params["rpack"]
    assert C == dim, "channel dim mismatch with prepared weights"
    compute_dtype = params["compute_dtype"]
    out_dtype = jnp.dtype(x.dtype if out_dtype is None else out_dtype)

    M = B * H * W
    c3 = 3 * dim

    # tm=512 amortizes per-step pipeline overhead on v6e/v7x; v5e is MXU-bound so a large
    # tm is also fine there. Cap on the f32 compute path (weights are 2x as big) and
    # shrink for tiny inputs. M is padded so any token count works.
    if jnp.dtype(compute_dtype).itemsize >= 4:
        tm = min(tm, 256)
    tm = max(8, min(tm, _round_up(M, 8)))
    Mp = _round_up(M, tm)

    x2 = x.reshape(M, C).astype(compute_dtype)
    if Mp != M:
        x2 = jnp.pad(x2, ((0, Mp - M), (0, 0)))

    cdt_b = jnp.dtype(compute_dtype).itemsize
    out_b = out_dtype.itemsize
    flops = 2 * Mp * C * c3 + 2 * Mp * C * rpack + 2 * Mp * rpack * 2 * C
    bytes_accessed = (Mp * C * cdt_b + (3 * C * C + C * rpack + rpack * 2 * C) * cdt_b
                      + c3 * 4 + Mp * c3 * out_b)
    cost = pl.CostEstimate(flops=flops, transcendentals=0, bytes_accessed=bytes_accessed)

    # Grid-invariant (weight-stationary) blocks: single-buffer them -- double-buffering a
    # constant index_map is pure VMEM waste (matters most on v7x's 64 MiB VMEM).
    def const_spec(shape):
        kwargs = {}
        if hasattr(pl, "Buffered"):
            kwargs["pipeline_mode"] = pl.Buffered(1)
        return pl.BlockSpec(shape, lambda i: (0, 0), **kwargs)

    kernel = functools.partial(_lora_qkv_kernel, dim=dim)

    out2 = pl.pallas_call(
        kernel,
        out_shape=jax.ShapeDtypeStruct((Mp, c3), out_dtype),
        grid_spec=pltpu.PrefetchScalarGridSpec(
            num_scalar_prefetch=0,
            grid=(Mp // tm,),
            in_specs=[
                pl.BlockSpec((tm, C), lambda i: (i, 0)),   # x tile (streamed over grid)
                const_spec((C, C)),                        # W_q^T
                const_spec((C, C)),                        # W_k^T
                const_spec((C, C)),                        # W_v^T
                const_spec((C, rpack)),                    # packed [A_q^T | A_v^T]
                const_spec((rpack, 2 * C)),                # block-structured [B_q^T ; B_v^T]
                const_spec((1, c3)),                       # qkv bias
            ],
            out_specs=pl.BlockSpec((tm, c3), lambda i: (i, 0)),
        ),
        compiler_params=pltpu.CompilerParams(
            dimension_semantics=("parallel",),
            vmem_limit_bytes=_vmem_limit_bytes(),
        ),
        cost_estimate=cost,
    )(x2, params["wq"], params["wk"], params["wv"],
      params["a_pack"], params["bqv"], params["bias"])

    if Mp != M:
        out2 = out2[:M]
    return out2.reshape(B, H, W, c3)


def lora_qkv(x, w_qkv, b_qkv, a_q, b_q, a_v, b_v, *, tm=512,
             compute_dtype=jnp.bfloat16, out_dtype=None):
    """Convenience wrapper: prep weights + apply (prep constant-folds under jit)."""
    params = prepare_lora_qkv_weights(w_qkv, b_qkv, a_q, b_q, a_v, b_v,
                                      compute_dtype=compute_dtype)
    return lora_qkv_apply(x, params, tm=tm, out_dtype=out_dtype)


def lora_qkv_reference(x, w_qkv, b_qkv, a_q, b_q, a_v, b_v):
    """Plain-JAX reference matching the PyTorch forward exactly (f32)."""
    qkv = jnp.einsum("bhwc,oc->bhwo", x, w_qkv) + b_qkv
    dim = x.shape[-1]
    new_q = jnp.einsum("bhwr,or->bhwo", jnp.einsum("bhwc,rc->bhwr", x, a_q), b_q)
    new_v = jnp.einsum("bhwr,or->bhwo", jnp.einsum("bhwc,rc->bhwr", x, a_v), b_v)
    qkv = qkv.at[..., :dim].add(new_q)
    qkv = qkv.at[..., -dim:].add(new_v)
    return qkv


if __name__ == "__main__":
    B, H, W, dim, r = 2, 8, 8, 32, 4
    key = jax.random.PRNGKey(0)
    kx, kw, kb, kaq, kbq, kav, kbv = jax.random.split(key, 7)

    x = jax.random.normal(kx, (B, H, W, dim), dtype=jnp.float32)

    # Deterministic synthetic parameters in PyTorch (out, in) convention.
    w_qkv = jax.random.normal(kw, (3 * dim, dim), dtype=jnp.float32) * 0.05
    b_qkv = jax.random.normal(kb, (3 * dim,), dtype=jnp.float32) * 0.05
    a_q = jax.random.normal(kaq, (r, dim), dtype=jnp.float32) * 0.05   # linear_a_q: dim -> r
    b_q = jax.random.normal(kbq, (dim, r), dtype=jnp.float32) * 0.05   # linear_b_q: r -> dim
    a_v = jax.random.normal(kav, (r, dim), dtype=jnp.float32) * 0.05   # linear_a_v: dim -> r
    b_v = jax.random.normal(kbv, (dim, r), dtype=jnp.float32) * 0.05   # linear_b_v: r -> dim

    ref = lora_qkv_reference(x, w_qkv, b_qkv, a_q, b_q, a_v, b_v)

    # 1) f32 compute path: tight correctness check against the reference.
    out_f32 = lora_qkv(x, w_qkv, b_qkv, a_q, b_q, a_v, b_v, compute_dtype=jnp.float32)
    out_f32 = jax.block_until_ready(out_f32)
    assert out_f32.shape == (B, H, W, 3 * dim)
    assert jnp.allclose(out_f32, ref, atol=1e-3, rtol=1e-3), "f32 kernel mismatch vs reference"

    # 2) bf16 MXU path (default, fast): loose tolerance for bf16 input quantization.
    out_bf16 = lora_qkv(x, w_qkv, b_qkv, a_q, b_q, a_v, b_v, compute_dtype=jnp.bfloat16)
    out_bf16 = jax.block_until_ready(out_bf16)
    assert out_bf16.shape == (B, H, W, 3 * dim)
    assert jnp.allclose(out_bf16, ref, atol=3e-2, rtol=3e-2), "bf16 kernel mismatch vs reference"

    # 3) bf16 output path (for v6e writeback-bound deployments): just check it runs & is close.
    out_bf16_out = lora_qkv(x, w_qkv, b_qkv, a_q, b_q, a_v, b_v,
                            compute_dtype=jnp.bfloat16, out_dtype=jnp.bfloat16)
    out_bf16_out = jax.block_until_ready(out_bf16_out)
    assert out_bf16_out.dtype == jnp.bfloat16
    assert jnp.allclose(out_bf16_out.astype(jnp.float32), ref, atol=5e-2, rtol=5e-2)

    print("KERNEL_OK")
</pallas_src>

<mosaic_0001>
module attributes {stable_mosaic.version = 11 : i64} {
  func.func @_lora_qkv_kernel(%arg0: i32, %arg1: memref<128x32xf32, #tpu.memory_space<vmem>>, %arg2: memref<32x32xf32, #tpu.memory_space<vmem>>, %arg3: memref<32x32xf32, #tpu.memory_space<vmem>>, %arg4: memref<32x32xf32, #tpu.memory_space<vmem>>, %arg5: memref<32x128xf32, #tpu.memory_space<vmem>>, %arg6: memref<128x64xf32, #tpu.memory_space<vmem>>, %arg7: memref<1x96xf32, #tpu.memory_space<vmem>>, %arg8: memref<128x96xf32, #tpu.memory_space<vmem>>) attributes {dimension_semantics = [#tpu.dimension_semantics<parallel>], iteration_bounds = array<i64: 1>, scalar_prefetch = 0 : i64, scratch_operands = 0 : i64, tpu.core_type = #tpu.core_type<tc>, window_params = [{transform_indices = @transform_0, window_bounds = array<i64: 128, 32>}, {pipeline_mode = #tpu.pipeline_mode<synchronous>, transform_indices = @transform_1, window_bounds = array<i64: 32, 32>}, {pipeline_mode = #tpu.pipeline_mode<synchronous>, transform_indices = @transform_2, window_bounds = array<i64: 32, 32>}, {pipeline_mode = #tpu.pipeline_mode<synchronous>, transform_indices = @transform_3, window_bounds = array<i64: 32, 32>}, {pipeline_mode = #tpu.pipeline_mode<synchronous>, transform_indices = @transform_4, window_bounds = array<i64: 32, 128>}, {pipeline_mode = #tpu.pipeline_mode<synchronous>, transform_indices = @transform_5, window_bounds = array<i64: 128, 64>}, {pipeline_mode = #tpu.pipeline_mode<synchronous>, transform_indices = @transform_6, window_bounds = array<i64: 1, 96>}, {transform_indices = @transform_7, window_bounds = array<i64: 128, 96>}]} {
    %c0 = arith.constant 0 : index
    %c0_0 = arith.constant 0 : index
    %0 = vector.load %arg1[%c0, %c0_0] : memref<128x32xf32, #tpu.memory_space<vmem>>, vector<128x32xf32>
    %c0_1 = arith.constant 0 : index
    %c0_2 = arith.constant 0 : index
    %1 = vector.load %arg7[%c0_1, %c0_2] : memref<1x96xf32, #tpu.memory_space<vmem>>, vector<1x96xf32>
    %c0_3 = arith.constant 0 : index
    %c0_4 = arith.constant 0 : index
    %2 = vector.load %arg5[%c0_3, %c0_4] : memref<32x128xf32, #tpu.memory_space<vmem>>, vector<32x128xf32>
    %cst = arith.constant dense<0.000000e+00> : vector<128x128xf32>
    %3 = tpu.matmul %0, %2, %cst {dimension_numbers = #tpu.dot_dimension_numbers<[1], [0], [0], [1], [0, 0, 1, 1], [], []>} : vector<128x32xf32>, vector<32x128xf32>, vector<128x128xf32> -> vector<128x128xf32>
    %c0_5 = arith.constant 0 : index
    %c0_6 = arith.constant 0 : index
    %4 = vector.load %arg2[%c0_5, %c0_6] : memref<32x32xf32, #tpu.memory_space<vmem>>, vector<32x32xf32>
    %cst_7 = arith.constant dense<0.000000e+00> : vector<128x32xf32>
    %5 = tpu.matmul %0, %4, %cst_7 {dimension_numbers = #tpu.dot_dimension_numbers<[1], [0], [0], [1], [0, 0, 1, 1], [], []>} : vector<128x32xf32>, vector<32x32xf32>, vector<128x32xf32> -> vector<128x32xf32>
    %c0_8 = arith.constant 0 : index
    %c0_9 = arith.constant 0 : index
    %6 = vector.load %arg6[%c0_8, %c0_9] : memref<128x64xf32, #tpu.memory_space<vmem>>, vector<128x32xf32>
    %cst_10 = arith.constant dense<0.000000e+00> : vector<128x32xf32>
    %7 = tpu.matmul %3, %6, %cst_10 {dimension_numbers = #tpu.dot_dimension_numbers<[1], [0], [0], [1], [0, 0, 1, 1], [], []>} : vector<128x128xf32>, vector<128x32xf32>, vector<128x32xf32> -> vector<128x32xf32>
    %8 = arith.addf %5, %7 : vector<128x32xf32>
    %9 = vector.extract_strided_slice %1 {offsets = [0, 0], sizes = [1, 32], strides = [1, 1]} : vector<1x96xf32> to vector<1x32xf32>
    %10 = vector.broadcast %9 : vector<1x32xf32> to vector<128x32xf32>
    %11 = arith.addf %8, %10 : vector<128x32xf32>
    %c0_11 = arith.constant 0 : index
    %c0_12 = arith.constant 0 : index
    %12 = vector.load %arg8[%c0_11, %c0_12] : memref<128x96xf32, #tpu.memory_space<vmem>>, vector<128x32xf32>
    tpu.vector_store %arg8[%c0_11, %c0_12], %11 {strides = array<i32>} : memref<128x96xf32, #tpu.memory_space<vmem>>, vector<128x32xf32>,
    %c0_13 = arith.constant 0 : index
    %c0_14 = arith.constant 0 : index
    %13 = vector.load %arg3[%c0_13, %c0_14] : memref<32x32xf32, #tpu.memory_space<vmem>>, vector<32x32xf32>
    %cst_15 = arith.constant dense<0.000000e+00> : vector<128x32xf32>
    %14 = tpu.matmul %0, %13, %cst_15 {dimension_numbers = #tpu.dot_dimension_numbers<[1], [0], [0], [1], [0, 0, 1, 1], [], []>} : vector<128x32xf32>, vector<32x32xf32>, vector<128x32xf32> -> vector<128x32xf32>
    %15 = vector.extract_strided_slice %1 {offsets = [0, 32], sizes = [1, 32], strides = [1, 1]} : vector<1x96xf32> to vector<1x32xf32>
    %16 = vector.broadcast %15 : vector<1x32xf32> to vector<128x32xf32>
    %17 = arith.addf %14, %16 : vector<128x32xf32>
    %c0_16 = arith.constant 0 : index
    %c32 = arith.constant 32 : index
    %18 = vector.load %arg8[%c0_16, %c32] : memref<128x96xf32, #tpu.memory_space<vmem>>, vector<128x32xf32>
    tpu.vector_store %arg8[%c0_16, %c32], %17 {strides = array<i32>} : memref<128x96xf32, #tpu.memory_space<vmem>>, vector<128x32xf32>,
    %c0_17 = arith.constant 0 : index
    %c0_18 = arith.constant 0 : index
    %19 = vector.load %arg4[%c0_17, %c0_18] : memref<32x32xf32, #tpu.memory_space<vmem>>, vector<32x32xf32>
    %cst_19 = arith.constant dense<0.000000e+00> : vector<128x32xf32>
    %20 = tpu.matmul %0, %19, %cst_19 {dimension_numbers = #tpu.dot_dimension_numbers<[1], [0], [0], [1], [0, 0, 1, 1], [], []>} : vector<128x32xf32>, vector<32x32xf32>, vector<128x32xf32> -> vector<128x32xf32>
    %c0_20 = arith.constant 0 : index
    %c32_21 = arith.constant 32 : index
    %21 = vector.load %arg6[%c0_20, %c32_21] : memref<128x64xf32, #tpu.memory_space<vmem>>, vector<128x32xf32>
    %cst_22 = arith.constant dense<0.000000e+00> : vector<128x32xf32>
    %22 = tpu.matmul %3, %21, %cst_22 {dimension_numbers = #tpu.dot_dimension_numbers<[1], [0], [0], [1], [0, 0, 1, 1], [], []>} : vector<128x128xf32>, vector<128x32xf32>, vector<128x32xf32> -> vector<128x32xf32>
    %23 = arith.addf %20, %22 : vector<128x32xf32>
    %24 = vector.extract_strided_slice %1 {offsets = [0, 64], sizes = [1, 32], strides = [1, 1]} : vector<1x96xf32> to vector<1x32xf32>
    %25 = vector.broadcast %24 : vector<1x32xf32> to vector<128x32xf32>
    %26 = arith.addf %23, %25 : vector<128x32xf32>
    %c0_23 = arith.constant 0 : index
    %c64 = arith.constant 64 : index
    %27 = vector.load %arg8[%c0_23, %c64] : memref<128x96xf32, #tpu.memory_space<vmem>>, vector<128x32xf32>
    tpu.vector_store %arg8[%c0_23, %c64], %26 {strides = array<i32>} : memref<128x96xf32, #tpu.memory_space<vmem>>, vector<128x32xf32>,
    return
  }
  func.func @transform_0(%arg0: i32) -> (i32, i32) {
    %c0_i32 = arith.constant 0 : i32
    %c0_i32_0 = arith.constant 0 : i32
    return %arg0, %c0_i32 : i32, i32
  }
  func.func @transform_1(%arg0: i32) -> (i32, i32) {
    %c0_i32 = arith.constant 0 : i32
    %c0_i32_0 = arith.constant 0 : i32
    %c0_i32_1 = arith.constant 0 : i32
    return %c0_i32, %c0_i32_0 : i32, i32
  }
  func.func @transform_2(%arg0: i32) -> (i32, i32) {
    %c0_i32 = arith.constant 0 : i32
    %c0_i32_0 = arith.constant 0 : i32
    %c0_i32_1 = arith.constant 0 : i32
    return %c0_i32, %c0_i32_0 : i32, i32
  }
  func.func @transform_3(%arg0: i32) -> (i32, i32) {
    %c0_i32 = arith.constant 0 : i32
    %c0_i32_0 = arith.constant 0 : i32
    %c0_i32_1 = arith.constant 0 : i32
    return %c0_i32, %c0_i32_0 : i32, i32
  }
  func.func @transform_4(%arg0: i32) -> (i32, i32) {
    %c0_i32 = arith.constant 0 : i32
    %c0_i32_0 = arith.constant 0 : i32
    %c0_i32_1 = arith.constant 0 : i32
    return %c0_i32, %c0_i32_0 : i32, i32
  }
  func.func @transform_5(%arg0: i32) -> (i32, i32) {
    %c0_i32 = arith.constant 0 : i32
    %c0_i32_0 = arith.constant 0 : i32
    %c0_i32_1 = arith.constant 0 : i32
    return %c0_i32, %c0_i32_0 : i32, i32
  }
  func.func @transform_6(%arg0: i32) -> (i32, i32) {
    %c0_i32 = arith.constant 0 : i32
    %c0_i32_0 = arith.constant 0 : i32
    %c0_i32_1 = arith.constant 0 : i32
    return %c0_i32, %c0_i32_0 : i32, i32
  }
  func.func @transform_7(%arg0: i32) -> (i32, i32) {
    %c0_i32 = arith.constant 0 : i32
    %c0_i32_0 = arith.constant 0 : i32
    return %arg0, %c0_i32 : i32, i32
  }
}

</mosaic_0001>

<llo_original>
// kernel: tpu_custom_call.1
$region0: #{tpu_custom_call.1}
  #allocation0 [shape = 'u32[]', space=smem, size = 0x4, offset = 0x4, fixed_abs, tag = 'smem constant byte address 0x4 - core index']
  #allocation1 [shape = 'u32[144,128]{1,0:T(1,128)}', space=vmem, size = 0x12000, scoped, tag = 'internal scratch']
  %s0 = inlined_call_operand.hbm [shape: f32[128,32], index: 0, kind: input, shape index: {}]
  %s1 = inlined_call_operand.hbm [shape: f32[32,32], index: 1, kind: input, shape index: {}]
  %s2 = inlined_call_operand.hbm [shape: f32[32,32], index: 2, kind: input, shape index: {}]
  %s3 = inlined_call_operand.hbm [shape: f32[32,32], index: 3, kind: input, shape index: {}]
  %s4 = inlined_call_operand.hbm [shape: f32[32,128], index: 4, kind: input, shape index: {}]
  %s5 = inlined_call_operand.hbm [shape: f32[128,64], index: 5, kind: input, shape index: {}]
  %s6 = inlined_call_operand.hbm [shape: f32[1,96], index: 6, kind: input, shape index: {}]
  %s7 = inlined_call_operand.hbm [shape: f32[128,96], index: 7, kind: output, shape index: {}]
  %s8 = sld [smem:[#allocation0]]
  $region66: #{tpu_custom_call.1} parent=0
    _
  %s10 = ssub.s32 1, %s8
  %s11 = scalar_select 0, %s10, %s8
  $region1: #{tpu_custom_call.1} parent=0
    #allocation2 [shape = 'u8[65536]{0}', space=vmem, size = 0x10000, scoped, tag = 'input window, operand 0, single buffered']
    #allocation3 [shape = 's32[1]{0}', space=sflag, size = 0x4, scoped, tag = 'scoped memory for tpu_custom_call.1']
    #allocation4 [shape = 's32[1]{0}', space=sflag, size = 0x4, scoped, tag = 'scoped memory for tpu_custom_call.1']
    #allocation5 [shape = 'u8[16384]{0}', space=vmem, size = 0x4000, scoped, tag = 'input window, operand 1, single buffered']
    #allocation6 [shape = 's32[1]{0}', space=sflag, size = 0x4, scoped, tag = 'scoped memory for tpu_custom_call.1']
    #allocation7 [shape = 'u8[16384]{0}', space=vmem, size = 0x4000, scoped, tag = 'input window, operand 2, single buffered']
    #allocation8 [shape = 'u8[16384]{0}', space=vmem, size = 0x4000, scoped, tag = 'input window, operand 3, single buffered']
    #allocation9 [shape = 's32[1]{0}', space=sflag, size = 0x4, scoped, tag = 'scoped memory for tpu_custom_call.1']
    #allocation10 [shape = 'u8[16384]{0}', space=vmem, size = 0x4000, scoped, tag = 'input window, operand 4, single buffered']
    #allocation11 [shape = 'u8[65536]{0}', space=vmem, size = 0x10000, scoped, tag = 'input window, operand 5, single buffered']
    #allocation12 [shape = 's32[1]{0}', space=sflag, size = 0x4, scoped, tag = 'scoped memory for tpu_custom_call.1']
    #allocation13 [shape = 'u8[512]{0}', space=vmem, size = 0x400, scoped, tag = 'input window, operand 6, single buffered']
    #allocation14 [shape = 'u8[65536]{0}', space=vmem, size = 0x10000, scoped, tag = 'output window, operand 0, single buffered']
    %12 = vsyncpa [#allocation3], 0
    %13 = vsyncpa [#allocation6], 0
    %14 = vsyncpa [#allocation9], 0
    %15 = vsyncpa [#allocation12], 0
    %16 = vsyncpa [#allocation4], 0
    // Predicated region
    $region2: #{tpu_custom_call.1} parent=1 // pred_check
      _
    $region3: #{tpu_custom_call.1} parent=1 // pred_check_branch
      %18 = sbr.rel (0) target = $region5
    $region4: #{tpu_custom_call.1} parent=1 // pred_region
      %s20 = ssub.s32 2048, 2048
      %21 = vsyncadd [#allocation3], %s20
      %s22 = sshll.u32 [#allocation2], 4
      %s23 = int_to_ptr.vmem [resolvable:$true] %s22
      %28 = dma.hbm_to_vmem [thread:$0]  %s0, 2048, %s23, [#allocation3], 128, 128, 8
    $region5: #{tpu_custom_call.1} parent=1 // pred_fallthru
      _
    // Predicated region
    $region6: #{tpu_custom_call.1} parent=1 // pred_check
      _
    $region7: #{tpu_custom_call.1} parent=1 // pred_check_branch
      %30 = sbr.rel (0) target = $region9
    $region8: #{tpu_custom_call.1} parent=1 // pred_region
      %s32 = ssub.s32 512, 512
      %33 = vsyncadd [#allocation6], %s32
      %s34 = sshll.u32 [#allocation5], 4
      %s35 = int_to_ptr.vmem [resolvable:$true] %s34
      %40 = dma.hbm_to_vmem [thread:$0]  %s1, 512, %s35, [#allocation6], 128, 128, 8
    $region9: #{tpu_custom_call.1} parent=1 // pred_fallthru
      _
    // Predicated region
    $region10: #{tpu_custom_call.1} parent=1 // pred_check
      _
    $region11: #{tpu_custom_call.1} parent=1 // pred_check_branch
      %42 = sbr.rel (0) target = $region13
    $region12: #{tpu_custom_call.1} parent=1 // pred_region
      %s44 = ssub.s32 512, 512
      %45 = vsyncadd [#allocation6], %s44
      %s46 = sshll.u32 [#allocation7], 4
      %s47 = int_to_ptr.vmem [resolvable:$true] %s46
      %52 = dma.hbm_to_vmem [thread:$0]  %s2, 512, %s47, [#allocation6], 128, 128, 8
    $region13: #{tpu_custom_call.1} parent=1 // pred_fallthru
      _
    // Predicated region
    $region14: #{tpu_custom_call.1} parent=1 // pred_check
      _
    $region15: #{tpu_custom_call.1} parent=1 // pred_check_branch
      %54 = sbr.rel (0) target = $region17
    $region16: #{tpu_custom_call.1} parent=1 // pred_region
      %s56 = ssub.s32 512, 512
      %57 = vsyncadd [#allocation9], %s56
      %s58 = sshll.u32 [#allocation8], 4
      %s59 = int_to_ptr.vmem [resolvable:$true] %s58
      %64 = dma.hbm_to_vmem [thread:$0]  %s3, 512, %s59, [#allocation9], 128, 128, 8
    $region17: #{tpu_custom_call.1} parent=1 // pred_fallthru
      _
    // Predicated region
    $region18: #{tpu_custom_call.1} parent=1 // pred_check
      _
    $region19: #{tpu_custom_call.1} parent=1 // pred_check_branch
      %66 = sbr.rel (0) target = $region21
    $region20: #{tpu_custom_call.1} parent=1 // pred_region
      %s68 = ssub.s32 512, 512
      %69 = vsyncadd [#allocation9], %s68
      %s70 = sshll.u32 [#allocation10], 4
      %s71 = int_to_ptr.vmem [resolvable:$true] %s70
      %76 = dma.hbm_to_vmem [thread:$0]  %s4, 512, %s71, [#allocation9], 128, 128, 8
    $region21: #{tpu_custom_call.1} parent=1 // pred_fallthru
      _
    // Predicated region
    $region22: #{tpu_custom_call.1} parent=1 // pred_check
      _
    $region23: #{tpu_custom_call.1} parent=1 // pred_check_branch
      %78 = sbr.rel (0) target = $region25
    $region24: #{tpu_custom_call.1} parent=1 // pred_region
      %s80 = ssub.s32 2048, 2048
      %81 = vsyncadd [#allocation12], %s80
      %s82 = sshll.u32 [#allocation11], 4
      %s83 = int_to_ptr.vmem [resolvable:$true] %s82
      %88 = dma.hbm_to_vmem [thread:$0]  %s5, 2048, %s83, [#allocation12], 128, 128, 8
    $region25: #{tpu_custom_call.1} parent=1 // pred_fallthru
      _
    // Predicated region
    $region26: #{tpu_custom_call.1} parent=1 // pred_check
      _
    $region27: #{tpu_custom_call.1} parent=1 // pred_check_branch
      %90 = sbr.rel (0) target = $region29
    $region28: #{tpu_custom_call.1} parent=1 // pred_region
      %s92 = ssub.s32 16, 16
      %93 = vsyncadd [#allocation12], %s92
      %s95 = sshll.u32 [#allocation13], 4
      %s96 = int_to_ptr.vmem [resolvable:$true] %s95
      %98 = dma.hbm_to_vmem [thread:$0]  %s6, 16, %s96, [#allocation12]
    $region29: #{tpu_custom_call.1} parent=1 // pred_fallthru
      _
    // Predicated region
    $region30: #{tpu_custom_call.1} parent=1 // pred_check
      _
    $region31: #{tpu_custom_call.1} parent=1 // pred_check_branch
      %100 = sbr.rel (0) target = $region33
    $region32: #{tpu_custom_call.1} parent=1 // pred_region
      %101 = dma.done [#allocation3], 2048
    $region33: #{tpu_custom_call.1} parent=1 // pred_fallthru
      _
    // Predicated region
    $region34: #{tpu_custom_call.1} parent=1 // pred_check
      _
    $region35: #{tpu_custom_call.1} parent=1 // pred_check_branch
      %103 = sbr.rel (0) target = $region37
    $region36: #{tpu_custom_call.1} parent=1 // pred_region
      %104 = dma.done [#allocation6], 512
    $region37: #{tpu_custom_call.1} parent=1 // pred_fallthru
      _
    // Predicated region
    $region38: #{tpu_custom_call.1} parent=1 // pred_check
      _
    $region39: #{tpu_custom_call.1} parent=1 // pred_check_branch
      %106 = sbr.rel (0) target = $region41
    $region40: #{tpu_custom_call.1} parent=1 // pred_region
      %107 = dma.done [#allocation6], 512
    $region41: #{tpu_custom_call.1} parent=1 // pred_fallthru
      _
    // Predicated region
    $region42: #{tpu_custom_call.1} parent=1 // pred_check
      _
    $region43: #{tpu_custom_call.1} parent=1 // pred_check_branch
      %109 = sbr.rel (0) target = $region45
    $region44: #{tpu_custom_call.1} parent=1 // pred_region
      %110 = dma.done [#allocation9], 512
    $region45: #{tpu_custom_call.1} parent=1 // pred_fallthru
      _
    // Predicated region
    $region46: #{tpu_custom_call.1} parent=1 // pred_check
      _
    $region47: #{tpu_custom_call.1} parent=1 // pred_check_branch
      %112 = sbr.rel (0) target = $region49
    $region48: #{tpu_custom_call.1} parent=1 // pred_region
      %113 = dma.done [#allocation9], 512
    $region49: #{tpu_custom_call.1} parent=1 // pred_fallthru
      _
    // Predicated region
    $region50: #{tpu_custom_call.1} parent=1 // pred_check
      _
    $region51: #{tpu_custom_call.1} parent=1 // pred_check_branch
      %115 = sbr.rel (0) target = $region53
    $region52: #{tpu_custom_call.1} parent=1 // pred_region
      %116 = dma.done [#allocation12], 2048
    $region53: #{tpu_custom_call.1} parent=1 // pred_fallthru
      _
    // Predicated region
    $region54: #{tpu_custom_call.1} parent=1 // pred_check
      _
    $region55: #{tpu_custom_call.1} parent=1 // pred_check_branch
      %118 = sbr.rel (0) target = $region57
    $region56: #{tpu_custom_call.1} parent=1 // pred_region
      %119 = dma.done [#allocation12], 16
    $region57: #{tpu_custom_call.1} parent=1 // pred_fallthru
      _
    %v120 = vld [vmem:[#allocation2] sm:$0xff]
    %v121 = vld [vmem:[#allocation2 + $0x8] sm:$0xff]
    %v122 = vld [vmem:[#allocation2 + $0x10] sm:$0xff]
    %v123 = vld [vmem:[#allocation2 + $0x18] sm:$0xff]
    %v124 = vld [vmem:[#allocation2 + $0x20] sm:$0xff]
    %v125 = vld [vmem:[#allocation2 + $0x28] sm:$0xff]
    %v126 = vld [vmem:[#allocation2 + $0x30] sm:$0xff]
    %v127 = vld [vmem:[#allocation2 + $0x38] sm:$0xff]
    %v128 = vld [vmem:[#allocation2 + $0x40] sm:$0xff]
    %v129 = vld [vmem:[#allocation2 + $0x48] sm:$0xff]
    %v130 = vld [vmem:[#allocation2 + $0x50] sm:$0xff]
    %v131 = vld [vmem:[#allocation2 + $0x58] sm:$0xff]
    %v132 = vld [vmem:[#allocation2 + $0x60] sm:$0xff]
    %v133 = vld [vmem:[#allocation2 + $0x68] sm:$0xff]
    %v134 = vld [vmem:[#allocation2 + $0x70] sm:$0xff]
    %v135 = vld [vmem:[#allocation2 + $0x78] sm:$0xff]
    %v136 = vld [vmem:[#allocation13] sm:$0x1]
    %v137 = vld [vmem:[#allocation10] sm:$0xff]
    %v138 = vld [vmem:[#allocation10 + $0x8] sm:$0xff]
    %v139 = vld [vmem:[#allocation10 + $0x10] sm:$0xff]
    %v140 = vld [vmem:[#allocation10 + $0x18] sm:$0xff]
    %vm141 = vcmask 261120
    %v143 = vsel %vm141, %v120, 0
    %v146 = vsel %vm141, %v121, 0
    %v149 = vsel %vm141, %v122, 0
    %v152 = vsel %vm141, %v123, 0
    %v155 = vsel %vm141, %v124, 0
    %v158 = vsel %vm141, %v125, 0
    %v161 = vsel %vm141, %v126, 0
    %v164 = vsel %vm141, %v127, 0
    %v167 = vsel %vm141, %v128, 0
    %v170 = vsel %vm141, %v129, 0
    %v173 = vsel %vm141, %v130, 0
    %v176 = vsel %vm141, %v131, 0
    %v179 = vsel %vm141, %v132, 0
    %v182 = vsel %vm141, %v133, 0
    %v185 = vsel %vm141, %v134, 0
    %v188 = vsel %vm141, %v135, 0
    %190 = vmatprep.subr.mxu0 0.0
    %191 = vmatpush1.msra.mxu0 %v137
    %192 = vmatprep.subr.mxu0 0.0
    %193 = vmatpush1.msra.mxu0 %v138
    %194 = vmatprep.subr.mxu0 0.0
    %195 = vmatpush1.msra.mxu0 %v139
    %196 = vmatprep.subr.mxu0 0.0
    %197 = vmatpush1.msra.mxu0 %v140
    %198 = vmatprep.subr.mxu0 0.0
    %199 = vmatpush1.msra.mxu0 0.0
    %200 = vmatprep.subr.mxu0 0.0
    %201 = vmatpush1.msra.mxu0 0.0
    %202 = vmatprep.subr.mxu0 0.0
    %203 = vmatpush1.msra.mxu0 0.0
    %204 = vmatprep.subr.mxu0 0.0
    %205 = vmatpush1.msra.mxu0 0.0
    %206 = vmatprep.subr.mxu0 0.0
    %207 = vmatpush1.msra.mxu0 0.0
    %208 = vmatprep.subr.mxu0 0.0
    %209 = vmatpush1.msra.mxu0 0.0
    %210 = vmatprep.subr.mxu0 0.0
    %211 = vmatpush1.msra.mxu0 0.0
    %212 = vmatprep.subr.mxu0 0.0
    %213 = vmatpush1.msra.mxu0 0.0
    %214 = vmatprep.subr.mxu0 0.0
    %215 = vmatpush1.msra.mxu0 0.0
    %216 = vmatprep.subr.mxu0 0.0
    %217 = vmatpush1.msra.mxu0 0.0
    %218 = vmatprep.subr.mxu0 0.0
    %219 = vmatpush1.msra.mxu0 0.0
    %220 = vmatprep.subr.mxu0 0.0
    %221 = vmatpush1.msra.mxu0 0.0
    %222 = vmatprep.subr.mxu0 0.0
    %223 = vmatpush1.msra.mxu0 0.0
    %224 = vmatprep.subr.mxu0 0.0
    %225 = vmatpush1.msra.mxu0 0.0
    %226 = vmatprep.subr.mxu0 0.0
    %227 = vmatpush1.msra.mxu0 0.0
    %228 = vmatprep.subr.mxu0 0.0
    %229 = vmatpush1.msra.mxu0 0.0
    %230 = vmatprep.subr.mxu0 0.0
    %231 = vmatpush1.msra.mxu0 0.0
    %232 = vmatprep.subr.mxu0 0.0
    %233 = vmatpush1.msra.mxu0 0.0
    %234 = vmatprep.subr.mxu0 0.0
    %235 = vmatpush1.msra.mxu0 0.0
    %236 = vmatprep.subr.mxu0 0.0
    %237 = vmatpush1.msra.mxu0 0.0
    %238 = vmatprep.subr.mxu0 0.0
    %239 = vmatpush1.msra.mxu0 0.0
    %240 = vmatprep.subr.mxu0 0.0
    %241 = vmatpush1.msra.mxu0 0.0
    %242 = vmatprep.subr.mxu0 0.0
    %243 = vmatpush1.msra.mxu0 0.0
    %244 = vmatprep.subr.mxu0 0.0
    %245 = vmatpush1.msra.mxu0 0.0
    %246 = vmatprep.subr.mxu0 0.0
    %247 = vmatpush1.msra.mxu0 0.0
    %248 = vmatprep.subr.mxu0 0.0
    %249 = vmatpush1.msra.mxu0 0.0
    %250 = vmatprep.subr.mxu0 0.0
    %251 = vmatpush1.msra.mxu0 0.0
    %252 = vmatprep.subr.mxu0 0.0
    %253 = vmatpush1.msra.mxu0 0.0
    %254 = vmatprep.mubr.f32.mxu0 0.0
    %255 = vmatmul.mubr.f32.gmra.mrb[0].mxu0 %v143
    %v256 = vpop.f32.mrb[0].mxu0
    %v257 = vadd.f32 0.0, %v256
    %v258 = vpop.f32.mrb[0].mxu0
    %259 = vmatprep.mubr.f32.mxu0 0.0
    %260 = vmatmul.mubr.f32.gmra.mrb[0].mxu0 %v146
    %v261 = vpop.f32.mrb[0].mxu0
    %v262 = vadd.f32 0.0, %v261
    %v263 = vpop.f32.mrb[0].mxu0
    %264 = vmatprep.mubr.f32.mxu0 0.0
    %265 = vmatmul.mubr.f32.gmra.mrb[0].mxu0 %v149
    %v266 = vpop.f32.mrb[0].mxu0
    %v267 = vadd.f32 0.0, %v266
    %v268 = vpop.f32.mrb[0].mxu0
    %269 = vmatprep.mubr.f32.mxu0 0.0
    %270 = vmatmul.mubr.f32.gmra.mrb[0].mxu0 %v152
    %v271 = vpop.f32.mrb[0].mxu0
    %v272 = vadd.f32 0.0, %v271
    %v273 = vpop.f32.mrb[0].mxu0
    %274 = vmatprep.mubr.f32.mxu0 0.0
    %275 = vmatmul.mubr.f32.gmra.mrb[0].mxu0 %v155
    %v276 = vpop.f32.mrb[0].mxu0
    %v277 = vadd.f32 0.0, %v276
    %v278 = vpop.f32.mrb[0].mxu0
    %279 = vmatprep.mubr.f32.mxu0 0.0
    %280 = vmatmul.mubr.f32.gmra.mrb[0].mxu0 %v158
    %v281 = vpop.f32.mrb[0].mxu0
    %v282 = vadd.f32 0.0, %v281
    %v283 = vpop.f32.mrb[0].mxu0
    %284 = vmatprep.mubr.f32.mxu0 0.0
    %285 = vmatmul.mubr.f32.gmra.mrb[0].mxu0 %v161
    %v286 = vpop.f32.mrb[0].mxu0
    %v287 = vadd.f32 0.0, %v286
    %v288 = vpop.f32.mrb[0].mxu0
    %289 = vmatprep.mubr.f32.mxu0 0.0
    %290 = vmatmul.mubr.f32.gmra.mrb[0].mxu0 %v164
    %v291 = vpop.f32.mrb[0].mxu0
    %v292 = vadd.f32 0.0, %v291
    %v293 = vpop.f32.mrb[0].mxu0
    %294 = vmatprep.mubr.f32.mxu0 0.0
    %295 = vmatmul.mubr.f32.gmra.mrb[0].mxu0 %v167
    %v296 = vpop.f32.mrb[0].mxu0
    %v297 = vadd.f32 0.0, %v296
    %v298 = vpop.f32.mrb[0].mxu0
    %299 = vmatprep.mubr.f32.mxu0 0.0
    %300 = vmatmul.mubr.f32.gmra.mrb[0].mxu0 %v170
    %v301 = vpop.f32.mrb[0].mxu0
    %v302 = vadd.f32 0.0, %v301
    %v303 = vpop.f32.mrb[0].mxu0
    %304 = vmatprep.mubr.f32.mxu0 0.0
    %305 = vmatmul.mubr.f32.gmra.mrb[0].mxu0 %v173
    %v306 = vpop.f32.mrb[0].mxu0
    %v307 = vadd.f32 0.0, %v306
    %v308 = vpop.f32.mrb[0].mxu0
    %309 = vmatprep.mubr.f32.mxu0 0.0
    %310 = vmatmul.mubr.f32.gmra.mrb[0].mxu0 %v176
    %v311 = vpop.f32.mrb[0].mxu0
    %v312 = vadd.f32 0.0, %v311
    %v313 = vpop.f32.mrb[0].mxu0
    %314 = vmatprep.mubr.f32.mxu0 0.0
    %315 = vmatmul.mubr.f32.gmra.mrb[0].mxu0 %v179
    %v316 = vpop.f32.mrb[0].mxu0
    %v317 = vadd.f32 0.0, %v316
    %v318 = vpop.f32.mrb[0].mxu0
    %319 = vmatprep.mubr.f32.mxu0 0.0
    %320 = vmatmul.mubr.f32.gmra.mrb[0].mxu0 %v182
    %v321 = vpop.f32.mrb[0].mxu0
    %v322 = vadd.f32 0.0, %v321
    %v323 = vpop.f32.mrb[0].mxu0
    %324 = vmatprep.mubr.f32.mxu0 0.0
    %325 = vmatmul.mubr.f32.gmra.mrb[0].mxu0 %v185
    %v326 = vpop.f32.mrb[0].mxu0
    %v327 = vadd.f32 0.0, %v326
    %v328 = vpop.f32.mrb[0].mxu0
    %329 = vmatprep.mubr.f32.mxu0 0.0
    %330 = vmatmul.mubr.f32.gmra.mrb[0].mxu0 %v188
    %v331 = vpop.f32.mrb[0].mxu0
    %v332 = vadd.f32 0.0, %v331
    %v333 = vpop.f32.mrb[0].mxu0
    %334 = vdwg.mxu0
    %v335 = vld [vmem:[#allocation5] sm:$0xff]
    %v336 = vld [vmem:[#allocation5 + $0x8] sm:$0xff]
    %v337 = vld [vmem:[#allocation5 + $0x10] sm:$0xff]
    %v338 = vld [vmem:[#allocation5 + $0x18] sm:$0xff]
    %v339 = vld [vmem:[#allocation11] sm:$0xff]
    %v340 = vld [vmem:[#allocation11 + $0x8] sm:$0xff]
    %v341 = vld [vmem:[#allocation11 + $0x10] sm:$0xff]
    %v342 = vld [vmem:[#allocation11 + $0x18] sm:$0xff]
    %v343 = vld [vmem:[#allocation11 + $0x20] sm:$0xff]
    %v344 = vld [vmem:[#allocation11 + $0x28] sm:$0xff]
    %v345 = vld [vmem:[#allocation11 + $0x30] sm:$0xff]
    %v346 = vld [vmem:[#allocation11 + $0x38] sm:$0xff]
    %v347 = vld [vmem:[#allocation11 + $0x40] sm:$0xff]
    %v348 = vld [vmem:[#allocation11 + $0x48] sm:$0xff]
    %v349 = vld [vmem:[#allocation11 + $0x50] sm:$0xff]
    %v350 = vld [vmem:[#allocation11 + $0x58] sm:$0xff]
    %v351 = vld [vmem:[#allocation11 + $0x60] sm:$0xff]
    %v352 = vld [vmem:[#allocation11 + $0x68] sm:$0xff]
    %v353 = vld [vmem:[#allocation11 + $0x70] sm:$0xff]
    %v354 = vld [vmem:[#allocation11 + $0x78] sm:$0xff]
    %355 = vmatprep.subr.mxu0 0.0
    %356 = vmatpush1.msra.mxu0 %v339
    %357 = vmatprep.subr.mxu0 0.0
    %358 = vmatpush1.msra.mxu0 %v340
    %359 = vmatprep.subr.mxu0 0.0
    %360 = vmatpush1.msra.mxu0 %v341
    %361 = vmatprep.subr.mxu0 0.0
    %362 = vmatpush1.msra.mxu0 %v342
    %363 = vmatprep.subr.mxu0 0.0
    %364 = vmatpush1.msra.mxu0 %v343
    %365 = vmatprep.subr.mxu0 0.0
    %366 = vmatpush1.msra.mxu0 %v344
    %367 = vmatprep.subr.mxu0 0.0
    %368 = vmatpush1.msra.mxu0 %v345
    %369 = vmatprep.subr.mxu0 0.0
    %370 = vmatpush1.msra.mxu0 %v346
    %371 = vmatprep.subr.mxu0 0.0
    %372 = vmatpush1.msra.mxu0 %v347
    %373 = vmatprep.subr.mxu0 0.0
    %374 = vmatpush1.msra.mxu0 %v348
    %375 = vmatprep.subr.mxu0 0.0
    %376 = vmatpush1.msra.mxu0 %v349
    %377 = vmatprep.subr.mxu0 0.0
    %378 = vmatpush1.msra.mxu0 %v350
    %379 = vmatprep.subr.mxu0 0.0
    %380 = vmatpush1.msra.mxu0 %v351
    %381 = vmatprep.subr.mxu0 0.0
    %382 = vmatpush1.msra.mxu0 %v352
    %383 = vmatprep.subr.mxu0 0.0
    %384 = vmatpush1.msra.mxu0 %v353
    %385 = vmatprep.subr.mxu0 0.0
    %386 = vmatpush1.msra.mxu0 %v354
    %387 = vmatprep.subr.mxu0 0.0
    %388 = vmatpush1.msra.mxu0 0.0
    %389 = vmatprep.subr.mxu0 0.0
    %390 = vmatpush1.msra.mxu0 0.0
    %391 = vmatprep.subr.mxu0 0.0
    %392 = vmatpush1.msra.mxu0 0.0
    %393 = vmatprep.subr.mxu0 0.0
    %394 = vmatpush1.msra.mxu0 0.0
    %395 = vmatprep.subr.mxu0 0.0
    %396 = vmatpush1.msra.mxu0 0.0
    %397 = vmatprep.subr.mxu0 0.0
    %398 = vmatpush1.msra.mxu0 0.0
    %399 = vmatprep.subr.mxu0 0.0
    %400 = vmatpush1.msra.mxu0 0.0
    %401 = vmatprep.subr.mxu0 0.0
    %402 = vmatpush1.msra.mxu0 0.0
    %403 = vmatprep.subr.mxu0 0.0
    %404 = vmatpush1.msra.mxu0 0.0
    %405 = vmatprep.subr.mxu0 0.0
    %406 = vmatpush1.msra.mxu0 0.0
    %407 = vmatprep.subr.mxu0 0.0
    %408 = vmatpush1.msra.mxu0 0.0
    %409 = vmatprep.subr.mxu0 0.0
    %410 = vmatpush1.msra.mxu0 0.0
    %411 = vmatprep.subr.mxu0 0.0
    %412 = vmatpush1.msra.mxu0 0.0
    %413 = vmatprep.subr.mxu0 0.0
    %414 = vmatpush1.msra.mxu0 0.0
    %415 = vmatprep.subr.mxu0 0.0
    %416 = vmatpush1.msra.mxu0 0.0
    %417 = vmatprep.subr.mxu0 0.0
    %418 = vmatpush1.msra.mxu0 0.0
    %419 = vmatprep.mubr.f32.mxu0 0.0
    %420 = vmatmul.mubr.f32.gmra.mrb[0].mxu0 %v257
    %v421 = vpop.f32.mrb[0].mxu0
    %v422 = vadd.f32 0.0, %v421
    %v423 = vpop.f32.mrb[0].mxu0
    %424 = vmatprep.mubr.f32.mxu0 0.0
    %425 = vmatmul.mubr.f32.gmra.mrb[0].mxu0 %v262
    %v426 = vpop.f32.mrb[0].mxu0
    %v427 = vadd.f32 0.0, %v426
    %v428 = vpop.f32.mrb[0].mxu0
    %429 = vmatprep.mubr.f32.mxu0 0.0
    %430 = vmatmul.mubr.f32.gmra.mrb[0].mxu0 %v267
    %v431 = vpop.f32.mrb[0].mxu0
    %v432 = vadd.f32 0.0, %v431
    %v433 = vpop.f32.mrb[0].mxu0
    %434 = vmatprep.mubr.f32.mxu0 0.0
    %435 = vmatmul.mubr.f32.gmra.mrb[0].mxu0 %v272
    %v436 = vpop.f32.mrb[0].mxu0
    %v437 = vadd.f32 0.0, %v436
    %v438 = vpop.f32.mrb[0].mxu0
    %439 = vmatprep.mubr.f32.mxu0 0.0
    %440 = vmatmul.mubr.f32.gmra.mrb[0].mxu0 %v277
    %v441 = vpop.f32.mrb[0].mxu0
    %v442 = vadd.f32 0.0, %v441
    %v443 = vpop.f32.mrb[0].mxu0
    %444 = vmatprep.mubr.f32.mxu0 0.0
    %445 = vmatmul.mubr.f32.gmra.mrb[0].mxu0 %v282
    %v446 = vpop.f32.mrb[0].mxu0
    %v447 = vadd.f32 0.0, %v446
    %v448 = vpop.f32.mrb[0].mxu0
    %449 = vmatprep.mubr.f32.mxu0 0.0
    %450 = vmatmul.mubr.f32.gmra.mrb[0].mxu0 %v287
    %v451 = vpop.f32.mrb[0].mxu0
    %v452 = vadd.f32 0.0, %v451
    %v453 = vpop.f32.mrb[0].mxu0
    %454 = vmatprep.mubr.f32.mxu0 0.0
    %455 = vmatmul.mubr.f32.gmra.mrb[0].mxu0 %v292
    %v456 = vpop.f32.mrb[0].mxu0
    %v457 = vadd.f32 0.0, %v456
    %v458 = vpop.f32.mrb[0].mxu0
    %459 = vmatprep.mubr.f32.mxu0 0.0
    %460 = vmatmul.mubr.f32.gmra.mrb[0].mxu0 %v297
    %v461 = vpop.f32.mrb[0].mxu0
    %v462 = vadd.f32 0.0, %v461
    %v463 = vpop.f32.mrb[0].mxu0
    %464 = vmatprep.mubr.f32.mxu0 0.0
    %465 = vmatmul.mubr.f32.gmra.mrb[0].mxu0 %v302
    %v466 = vpop.f32.mrb[0].mxu0
    %v467 = vadd.f32 0.0, %v466
    %v468 = vpop.f32.mrb[0].mxu0
    %469 = vmatprep.mubr.f32.mxu0 0.0
    %470 = vmatmul.mubr.f32.gmra.mrb[0].mxu0 %v307
    %v471 = vpop.f32.mrb[0].mxu0
    %v472 = vadd.f32 0.0, %v471
    %v473 = vpop.f32.mrb[0].mxu0
    %474 = vmatprep.mubr.f32.mxu0 0.0
    %475 = vmatmul.mubr.f32.gmra.mrb[0].mxu0 %v312
    %v476 = vpop.f32.mrb[0].mxu0
    %v477 = vadd.f32 0.0, %v476
    %v478 = vpop.f32.mrb[0].mxu0
    %479 = vmatprep.mubr.f32.mxu0 0.0
    %480 = vmatmul.mubr.f32.gmra.mrb[0].mxu0 %v317
    %v481 = vpop.f32.mrb[0].mxu0
    %v482 = vadd.f32 0.0, %v481
    %v483 = vpop.f32.mrb[0].mxu0
    %484 = vmatprep.mubr.f32.mxu0 0.0
    %485 = vmatmul.mubr.f32.gmra.mrb[0].mxu0 %v322
    %v486 = vpop.f32.mrb[0].mxu0
    %v487 = vadd.f32 0.0, %v486
    %v488 = vpop.f32.mrb[0].mxu0
    %489 = vmatprep.mubr.f32.mxu0 0.0
    %490 = vmatmul.mubr.f32.gmra.mrb[0].mxu0 %v327
    %v491 = vpop.f32.mrb[0].mxu0
    %v492 = vadd.f32 0.0, %v491
    %v493 = vpop.f32.mrb[0].mxu0
    %494 = vmatprep.mubr.f32.mxu0 0.0
    %495 = vmatmul.mubr.f32.gmra.mrb[0].mxu0 %v332
    %v496 = vpop.f32.mrb[0].mxu0
    %v497 = vadd.f32 0.0, %v496
    %v498 = vpop.f32.mrb[0].mxu0
    %499 = vdwg.mxu0
    %500 = vmatprep.subr.mxu0 0.0
    %501 = vmatpush1.msra.mxu0 %v335
    %502 = vmatprep.subr.mxu0 0.0
    %503 = vmatpush1.msra.mxu0 %v336
    %504 = vmatprep.subr.mxu0 0.0
    %505 = vmatpush1.msra.mxu0 %v337
    %506 = vmatprep.subr.mxu0 0.0
    %507 = vmatpush1.msra.mxu0 %v338
    %508 = vmatprep.subr.mxu0 0.0
    %509 = vmatpush1.msra.mxu0 0.0
    %510 = vmatprep.subr.mxu0 0.0
    %511 = vmatpush1.msra.mxu0 0.0
    %512 = vmatprep.subr.mxu0 0.0
    %513 = vmatpush1.msra.mxu0 0.0
    %514 = vmatprep.subr.mxu0 0.0
    %515 = vmatpush1.msra.mxu0 0.0
    %516 = vmatprep.subr.mxu0 0.0
    %517 = vmatpush1.msra.mxu0 0.0
    %518 = vmatprep.subr.mxu0 0.0
    %519 = vmatpush1.msra.mxu0 0.0
    %520 = vmatprep.subr.mxu0 0.0
    %521 = vmatpush1.msra.mxu0 0.0
    %522 = vmatprep.subr.mxu0 0.0
    %523 = vmatpush1.msra.mxu0 0.0
    %524 = vmatprep.subr.mxu0 0.0
    %525 = vmatpush1.msra.mxu0 0.0
    %526 = vmatprep.subr.mxu0 0.0
    %527 = vmatpush1.msra.mxu0 0.0
    %528 = vmatprep.subr.mxu0 0.0
    %529 = vmatpush1.msra.mxu0 0.0
    %530 = vmatprep.subr.mxu0 0.0
    %531 = vmatpush1.msra.mxu0 0.0
    %532 = vmatprep.subr.mxu0 0.0
    %533 = vmatpush1.msra.mxu0 0.0
    %534 = vmatprep.subr.mxu0 0.0
    %535 = vmatpush1.msra.mxu0 0.0
    %536 = vmatprep.subr.mxu0 0.0
    %537 = vmatpush1.msra.mxu0 0.0
    %538 = vmatprep.subr.mxu0 0.0
    %539 = vmatpush1.msra.mxu0 0.0
    %540 = vmatprep.subr.mxu0 0.0
    %541 = vmatpush1.msra.mxu0 0.0
    %542 = vmatprep.subr.mxu0 0.0
    %543 = vmatpush1.msra.mxu0 0.0
    %544 = vmatprep.subr.mxu0 0.0
    %545 = vmatpush1.msra.mxu0 0.0
    %546 = vmatprep.subr.mxu0 0.0
    %547 = vmatpush1.msra.mxu0 0.0
    %548 = vmatprep.subr.mxu0 0.0
    %549 = vmatpush1.msra.mxu0 0.0
    %550 = vmatprep.subr.mxu0 0.0
    %551 = vmatpush1.msra.mxu0 0.0
    %552 = vmatprep.subr.mxu0 0.0
    %553 = vmatpush1.msra.mxu0 0.0
    %554 = vmatprep.subr.mxu0 0.0
    %555 = vmatpush1.msra.mxu0 0.0
    %556 = vmatprep.subr.mxu0 0.0
    %557 = vmatpush1.msra.mxu0 0.0
    %558 = vmatprep.subr.mxu0 0.0
    %559 = vmatpush1.msra.mxu0 0.0
    %560 = vmatprep.subr.mxu0 0.0
    %561 = vmatpush1.msra.mxu0 0.0
    %562 = vmatprep.subr.mxu0 0.0
    %563 = vmatpush1.msra.mxu0 0.0
    %564 = vmatprep.mubr.f32.mxu0 0.0
    %565 = vmatmul.mubr.f32.gmra.mrb[0].mxu0 %v143
    %v566 = vpop.f32.mrb[0].mxu0
    %v567 = vadd.f32 %v422, %v566
    %v568 = vpop.f32.mrb[0].mxu0
    %569 = vmatprep.mubr.f32.mxu0 0.0
    %570 = vmatmul.mubr.f32.gmra.mrb[0].mxu0 %v146
    %v571 = vpop.f32.mrb[0].mxu0
    %v572 = vadd.f32 %v427, %v571
    %v573 = vpop.f32.mrb[0].mxu0
    %574 = vmatprep.mubr.f32.mxu0 0.0
    %575 = vmatmul.mubr.f32.gmra.mrb[0].mxu0 %v149
    %v576 = vpop.f32.mrb[0].mxu0
    %v577 = vadd.f32 %v432, %v576
    %v578 = vpop.f32.mrb[0].mxu0
    %579 = vmatprep.mubr.f32.mxu0 0.0
    %580 = vmatmul.mubr.f32.gmra.mrb[0].mxu0 %v152
    %v581 = vpop.f32.mrb[0].mxu0
    %v582 = vadd.f32 %v437, %v581
    %v583 = vpop.f32.mrb[0].mxu0
    %584 = vmatprep.mubr.f32.mxu0 0.0
    %585 = vmatmul.mubr.f32.gmra.mrb[0].mxu0 %v155
    %v586 = vpop.f32.mrb[0].mxu0
    %v587 = vadd.f32 %v442, %v586
    %v588 = vpop.f32.mrb[0].mxu0
    %589 = vmatprep.mubr.f32.mxu0 0.0
    %590 = vmatmul.mubr.f32.gmra.mrb[0].mxu0 %v158
    %v591 = vpop.f32.mrb[0].mxu0
    %v592 = vadd.f32 %v447, %v591
    %v593 = vpop.f32.mrb[0].mxu0
    %594 = vmatprep.mubr.f32.mxu0 0.0
    %595 = vmatmul.mubr.f32.gmra.mrb[0].mxu0 %v161
    %v596 = vpop.f32.mrb[0].mxu0
    %v597 = vadd.f32 %v452, %v596
    %v598 = vpop.f32.mrb[0].mxu0
    %599 = vmatprep.mubr.f32.mxu0 0.0
    %600 = vmatmul.mubr.f32.gmra.mrb[0].mxu0 %v164
    %v601 = vpop.f32.mrb[0].mxu0
    %v602 = vadd.f32 %v457, %v601
    %v603 = vpop.f32.mrb[0].mxu0
    %604 = vmatprep.mubr.f32.mxu0 0.0
    %605 = vmatmul.mubr.f32.gmra.mrb[0].mxu0 %v167
    %v606 = vpop.f32.mrb[0].mxu0
    %v607 = vadd.f32 %v462, %v606
    %v608 = vpop.f32.mrb[0].mxu0
    %609 = vmatprep.mubr.f32.mxu0 0.0
    %610 = vmatmul.mubr.f32.gmra.mrb[0].mxu0 %v170
    %v611 = vpop.f32.mrb[0].mxu0
    %v612 = vadd.f32 %v467, %v611
    %v613 = vpop.f32.mrb[0].mxu0
    %614 = vmatprep.mubr.f32.mxu0 0.0
    %615 = vmatmul.mubr.f32.gmra.mrb[0].mxu0 %v173
    %v616 = vpop.f32.mrb[0].mxu0
    %v617 = vadd.f32 %v472, %v616
    %v618 = vpop.f32.mrb[0].mxu0
    %619 = vmatprep.mubr.f32.mxu0 0.0
    %620 = vmatmul.mubr.f32.gmra.mrb[0].mxu0 %v176
    %v621 = vpop.f32.mrb[0].mxu0
    %v622 = vadd.f32 %v477, %v621
    %v623 = vpop.f32.mrb[0].mxu0
    %624 = vmatprep.mubr.f32.mxu0 0.0
    %625 = vmatmul.mubr.f32.gmra.mrb[0].mxu0 %v179
    %v626 = vpop.f32.mrb[0].mxu0
    %v627 = vadd.f32 %v482, %v626
    %v628 = vpop.f32.mrb[0].mxu0
    %629 = vmatprep.mubr.f32.mxu0 0.0
    %630 = vmatmul.mubr.f32.gmra.mrb[0].mxu0 %v182
    %v631 = vpop.f32.mrb[0].mxu0
    %v632 = vadd.f32 %v487, %v631
    %v633 = vpop.f32.mrb[0].mxu0
    %634 = vmatprep.mubr.f32.mxu0 0.0
    %635 = vmatmul.mubr.f32.gmra.mrb[0].mxu0 %v185
    %v636 = vpop.f32.mrb[0].mxu0
    %v637 = vadd.f32 %v492, %v636
    %v638 = vpop.f32.mrb[0].mxu0
    %639 = vmatprep.mubr.f32.mxu0 0.0
    %640 = vmatmul.mubr.f32.gmra.mrb[0].mxu0 %v188
    %v641 = vpop.f32.mrb[0].mxu0
    %v642 = vadd.f32 %v497, %v641
    %v643 = vpop.f32.mrb[0].mxu0
    %644 = vdwg.mxu0
    %v646 = vlaneseq
    %v647 = vshrl.u32 %v646, 7
    %v648 = vsub.s32 0, %v647
    %v649 = vrot.slane %v136, %v648
    %v651 = vadd.f32 %v567, %v649
    %v652 = vadd.f32 %v572, %v649
    %v653 = vadd.f32 %v577, %v649
    %v654 = vadd.f32 %v582, %v649
    %v655 = vadd.f32 %v587, %v649
    %v656 = vadd.f32 %v592, %v649
    %v657 = vadd.f32 %v597, %v649
    %v658 = vadd.f32 %v602, %v649
    %v659 = vadd.f32 %v607, %v649
    %v660 = vadd.f32 %v612, %v649
    %v661 = vadd.f32 %v617, %v649
    %v662 = vadd.f32 %v622, %v649
    %v663 = vadd.f32 %v627, %v649
    %v664 = vadd.f32 %v632, %v649
    %v665 = vadd.f32 %v637, %v649
    %v666 = vadd.f32 %v642, %v649
    %667 = vst.msk [vmem:[#allocation14] sm:$0xff] %vm141, %v651
    %668 = vst.msk [vmem:[#allocation14 + $0x8] sm:$0xff] %vm141, %v652
    %669 = vst.msk [vmem:[#allocation14 + $0x10] sm:$0xff] %vm141, %v653
    %670 = vst.msk [vmem:[#allocation14 + $0x18] sm:$0xff] %vm141, %v654
    %671 = vst.msk [vmem:[#allocation14 + $0x20] sm:$0xff] %vm141, %v655
    %672 = vst.msk [vmem:[#allocation14 + $0x28] sm:$0xff] %vm141, %v656
    %673 = vst.msk [vmem:[#allocation14 + $0x30] sm:$0xff] %vm141, %v657
    %674 = vst.msk [vmem:[#allocation14 + $0x38] sm:$0xff] %vm141, %v658
    %675 = vst.msk [vmem:[#allocation14 + $0x40] sm:$0xff] %vm141, %v659
    %676 = vst.msk [vmem:[#allocation14 + $0x48] sm:$0xff] %vm141, %v660
    %677 = vst.msk [vmem:[#allocation14 + $0x50] sm:$0xff] %vm141, %v661
    %678 = vst.msk [vmem:[#allocation14 + $0x58] sm:$0xff] %vm141, %v662
    %679 = vst.msk [vmem:[#allocation14 + $0x60] sm:$0xff] %vm141, %v663
    %680 = vst.msk [vmem:[#allocation14 + $0x68] sm:$0xff] %vm141, %v664
    %681 = vst.msk [vmem:[#allocation14 + $0x70] sm:$0xff] %vm141, %v665
    %682 = vst.msk [vmem:[#allocation14 + $0x78] sm:$0xff] %vm141, %v666
    %v683 = vld [vmem:[#allocation7] sm:$0xff]
    %v684 = vld [vmem:[#allocation7 + $0x8] sm:$0xff]
    %v685 = vld [vmem:[#allocation7 + $0x10] sm:$0xff]
    %v686 = vld [vmem:[#allocation7 + $0x18] sm:$0xff]
    %687 = vrot.lane.b32.xlu0 %v649, 96
    %v688 = vpop.permute.xlu0 %687
    %690 = vmatprep.subr.mxu0 0.0
    %691 = vmatpush1.msra.mxu0 %v683
    %692 = vmatprep.subr.mxu0 0.0
    %693 = vmatpush1.msra.mxu0 %v684
    %694 = vmatprep.subr.mxu0 0.0
    %695 = vmatpush1.msra.mxu0 %v685
    %696 = vmatprep.subr.mxu0 0.0
    %697 = vmatpush1.msra.mxu0 %v686
    %698 = vmatprep.subr.mxu0 0.0
    %699 = vmatpush1.msra.mxu0 0.0
    %700 = vmatprep.subr.mxu0 0.0
    %701 = vmatpush1.msra.mxu0 0.0
    %702 = vmatprep.subr.mxu0 0.0
    %703 = vmatpush1.msra.mxu0 0.0
    %704 = vmatprep.subr.mxu0 0.0
    %705 = vmatpush1.msra.mxu0 0.0
    %706 = vmatprep.subr.mxu0 0.0
    %707 = vmatpush1.msra.mxu0 0.0
    %708 = vmatprep.subr.mxu0 0.0
    %709 = vmatpush1.msra.mxu0 0.0
    %710 = vmatprep.subr.mxu0 0.0
    %711 = vmatpush1.msra.mxu0 0.0
    %712 = vmatprep.subr.mxu0 0.0
    %713 = vmatpush1.msra.mxu0 0.0
    %714 = vmatprep.subr.mxu0 0.0
    %715 = vmatpush1.msra.mxu0 0.0
    %716 = vmatprep.subr.mxu0 0.0
    %717 = vmatpush1.msra.mxu0 0.0
    %718 = vmatprep.subr.mxu0 0.0
    %719 = vmatpush1.msra.mxu0 0.0
    %720 = vmatprep.subr.mxu0 0.0
    %721 = vmatpush1.msra.mxu0 0.0
    %722 = vmatprep.subr.mxu0 0.0
    %723 = vmatpush1.msra.mxu0 0.0
    %724 = vmatprep.subr.mxu0 0.0
    %725 = vmatpush1.msra.mxu0 0.0
    %726 = vmatprep.subr.mxu0 0.0
    %727 = vmatpush1.msra.mxu0 0.0
    %728 = vmatprep.subr.mxu0 0.0
    %729 = vmatpush1.msra.mxu0 0.0
    %730 = vmatprep.subr.mxu0 0.0
    %731 = vmatpush1.msra.mxu0 0.0
    %732 = vmatprep.subr.mxu0 0.0
    %733 = vmatpush1.msra.mxu0 0.0
    %734 = vmatprep.subr.mxu0 0.0
    %735 = vmatpush1.msra.mxu0 0.0
    %736 = vmatprep.subr.mxu0 0.0
    %737 = vmatpush1.msra.mxu0 0.0
    %738 = vmatprep.subr.mxu0 0.0
    %739 = vmatpush1.msra.mxu0 0.0
    %740 = vmatprep.subr.mxu0 0.0
    %741 = vmatpush1.msra.mxu0 0.0
    %742 = vmatprep.subr.mxu0 0.0
    %743 = vmatpush1.msra.mxu0 0.0
    %744 = vmatprep.subr.mxu0 0.0
    %745 = vmatpush1.msra.mxu0 0.0
    %746 = vmatprep.subr.mxu0 0.0
    %747 = vmatpush1.msra.mxu0 0.0
    %748 = vmatprep.subr.mxu0 0.0
    %749 = vmatpush1.msra.mxu0 0.0
    %750 = vmatprep.subr.mxu0 0.0
    %751 = vmatpush1.msra.mxu0 0.0
    %752 = vmatprep.subr.mxu0 0.0
    %753 = vmatpush1.msra.mxu0 0.0
    %754 = vmatprep.mubr.f32.mxu0 0.0
    %755 = vmatmul.mubr.f32.gmra.mrb[0].mxu0 %v143
    %v756 = vpop.f32.mrb[0].mxu0
    %v757 = vadd.f32 %v688, %v756
    %v758 = vpop.f32.mrb[0].mxu0
    %759 = vmatprep.mubr.f32.mxu0 0.0
    %760 = vmatmul.mubr.f32.gmra.mrb[0].mxu0 %v146
    %v761 = vpop.f32.mrb[0].mxu0
    %v762 = vadd.f32 %v688, %v761
    %v763 = vpop.f32.mrb[0].mxu0
    %764 = vmatprep.mubr.f32.mxu0 0.0
    %765 = vmatmul.mubr.f32.gmra.mrb[0].mxu0 %v149
    %v766 = vpop.f32.mrb[0].mxu0
    %v767 = vadd.f32 %v688, %v766
    %v768 = vpop.f32.mrb[0].mxu0
    %769 = vmatprep.mubr.f32.mxu0 0.0
    %770 = vmatmul.mubr.f32.gmra.mrb[0].mxu0 %v152
    %v771 = vpop.f32.mrb[0].mxu0
    %v772 = vadd.f32 %v688, %v771
    %v773 = vpop.f32.mrb[0].mxu0
    %774 = vmatprep.mubr.f32.mxu0 0.0
    %775 = vmatmul.mubr.f32.gmra.mrb[0].mxu0 %v155
    %v776 = vpop.f32.mrb[0].mxu0
    %v777 = vadd.f32 %v688, %v776
    %v778 = vpop.f32.mrb[0].mxu0
    %779 = vmatprep.mubr.f32.mxu0 0.0
    %780 = vmatmul.mubr.f32.gmra.mrb[0].mxu0 %v158
    %v781 = vpop.f32.mrb[0].mxu0
    %v782 = vadd.f32 %v688, %v781
    %v783 = vpop.f32.mrb[0].mxu0
    %784 = vmatprep.mubr.f32.mxu0 0.0
    %785 = vmatmul.mubr.f32.gmra.mrb[0].mxu0 %v161
    %v786 = vpop.f32.mrb[0].mxu0
    %v787 = vadd.f32 %v688, %v786
    %v788 = vpop.f32.mrb[0].mxu0
    %789 = vmatprep.mubr.f32.mxu0 0.0
    %790 = vmatmul.mubr.f32.gmra.mrb[0].mxu0 %v164
    %v791 = vpop.f32.mrb[0].mxu0
    %v792 = vadd.f32 %v688, %v791
    %v793 = vpop.f32.mrb[0].mxu0
    %794 = vmatprep.mubr.f32.mxu0 0.0
    %795 = vmatmul.mubr.f32.gmra.mrb[0].mxu0 %v167
    %v796 = vpop.f32.mrb[0].mxu0
    %v797 = vadd.f32 %v688, %v796
    %v798 = vpop.f32.mrb[0].mxu0
    %799 = vmatprep.mubr.f32.mxu0 0.0
    %800 = vmatmul.mubr.f32.gmra.mrb[0].mxu0 %v170
    %v801 = vpop.f32.mrb[0].mxu0
    %v802 = vadd.f32 %v688, %v801
    %v803 = vpop.f32.mrb[0].mxu0
    %804 = vmatprep.mubr.f32.mxu0 0.0
    %805 = vmatmul.mubr.f32.gmra.mrb[0].mxu0 %v173
    %v806 = vpop.f32.mrb[0].mxu0
    %v807 = vadd.f32 %v688, %v806
    %v808 = vpop.f32.mrb[0].mxu0
    %809 = vmatprep.mubr.f32.mxu0 0.0
    %810 = vmatmul.mubr.f32.gmra.mrb[0].mxu0 %v176
    %v811 = vpop.f32.mrb[0].mxu0
    %v812 = vadd.f32 %v688, %v811
    %v813 = vpop.f32.mrb[0].mxu0
    %814 = vmatprep.mubr.f32.mxu0 0.0
    %815 = vmatmul.mubr.f32.gmra.mrb[0].mxu0 %v179
    %v816 = vpop.f32.mrb[0].mxu0
    %v817 = vadd.f32 %v688, %v816
    %v818 = vpop.f32.mrb[0].mxu0
    %819 = vmatprep.mubr.f32.mxu0 0.0
    %820 = vmatmul.mubr.f32.gmra.mrb[0].mxu0 %v182
    %v821 = vpop.f32.mrb[0].mxu0
    %v822 = vadd.f32 %v688, %v821
    %v823 = vpop.f32.mrb[0].mxu0
    %824 = vmatprep.mubr.f32.mxu0 0.0
    %825 = vmatmul.mubr.f32.gmra.mrb[0].mxu0 %v185
    %v826 = vpop.f32.mrb[0].mxu0
    %v827 = vadd.f32 %v688, %v826
    %v828 = vpop.f32.mrb[0].mxu0
    %829 = vmatprep.mubr.f32.mxu0 0.0
    %830 = vmatmul.mubr.f32.gmra.mrb[0].mxu0 %v188
    %v831 = vpop.f32.mrb[0].mxu0
    %v832 = vadd.f32 %v688, %v831
    %v833 = vpop.f32.mrb[0].mxu0
    %834 = vdwg.mxu0
    %851 = vrot.lane.b32.xlu0 %v757, 32
    %v852 = vpop.permute.xlu0 %851
    %853 = vrot.lane.b32.xlu0 %v762, 32
    %v854 = vpop.permute.xlu0 %853
    %855 = vrot.lane.b32.xlu0 %v767, 32
    %v856 = vpop.permute.xlu0 %855
    %857 = vrot.lane.b32.xlu0 %v772, 32
    %v858 = vpop.permute.xlu0 %857
    %859 = vrot.lane.b32.xlu0 %v777, 32
    %v860 = vpop.permute.xlu0 %859
    %861 = vrot.lane.b32.xlu0 %v782, 32
    %v862 = vpop.permute.xlu0 %861
    %863 = vrot.lane.b32.xlu0 %v787, 32
    %v864 = vpop.permute.xlu0 %863
    %865 = vrot.lane.b32.xlu0 %v792, 32
    %v866 = vpop.permute.xlu0 %865
    %867 = vrot.lane.b32.xlu0 %v797, 32
    %v868 = vpop.permute.xlu0 %867
    %869 = vrot.lane.b32.xlu0 %v802, 32
    %v870 = vpop.permute.xlu0 %869
    %871 = vrot.lane.b32.xlu0 %v807, 32
    %v872 = vpop.permute.xlu0 %871
    %873 = vrot.lane.b32.xlu0 %v812, 32
    %v874 = vpop.permute.xlu0 %873
    %875 = vrot.lane.b32.xlu0 %v817, 32
    %v876 = vpop.permute.xlu0 %875
    %877 = vrot.lane.b32.xlu0 %v822, 32
    %v878 = vpop.permute.xlu0 %877
    %879 = vrot.lane.b32.xlu0 %v827, 32
    %v880 = vpop.permute.xlu0 %879
    %881 = vrot.lane.b32.xlu0 %v832, 32
    %v882 = vpop.permute.xlu0 %881
    %vm899 = vcmask 523520
    %900 = vst.msk [vmem:[#allocation14] sm:$0xff] %vm899, %v852
    %901 = vst.msk [vmem:[#allocation14 + $0x8] sm:$0xff] %vm899, %v854
    %902 = vst.msk [vmem:[#allocation14 + $0x10] sm:$0xff] %vm899, %v856
    %903 = vst.msk [vmem:[#allocation14 + $0x18] sm:$0xff] %vm899, %v858
    %904 = vst.msk [vmem:[#allocation14 + $0x20] sm:$0xff] %vm899, %v860
    %905 = vst.msk [vmem:[#allocation14 + $0x28] sm:$0xff] %vm899, %v862
    %906 = vst.msk [vmem:[#allocation14 + $0x30] sm:$0xff] %vm899, %v864
    %907 = vst.msk [vmem:[#allocation14 + $0x38] sm:$0xff] %vm899, %v866
    %908 = vst.msk [vmem:[#allocation14 + $0x40] sm:$0xff] %vm899, %v868
    %909 = vst.msk [vmem:[#allocation14 + $0x48] sm:$0xff] %vm899, %v870
    %910 = vst.msk [vmem:[#allocation14 + $0x50] sm:$0xff] %vm899, %v872
    %911 = vst.msk [vmem:[#allocation14 + $0x58] sm:$0xff] %vm899, %v874
    %912 = vst.msk [vmem:[#allocation14 + $0x60] sm:$0xff] %vm899, %v876
    %913 = vst.msk [vmem:[#allocation14 + $0x68] sm:$0xff] %vm899, %v878
    %914 = vst.msk [vmem:[#allocation14 + $0x70] sm:$0xff] %vm899, %v880
    %915 = vst.msk [vmem:[#allocation14 + $0x78] sm:$0xff] %vm899, %v882
    %v916 = vld [vmem:[#allocation8] sm:$0xff]
    %v917 = vld [vmem:[#allocation8 + $0x8] sm:$0xff]
    %v918 = vld [vmem:[#allocation8 + $0x10] sm:$0xff]
    %v919 = vld [vmem:[#allocation8 + $0x18] sm:$0xff]
    %v920 = vld [vmem:[#allocation11] sm:$0xff]
    %v921 = vld [vmem:[#allocation11 + $0x8] sm:$0xff]
    %v922 = vld [vmem:[#allocation11 + $0x10] sm:$0xff]
    %v923 = vld [vmem:[#allocation11 + $0x18] sm:$0xff]
    %v924 = vld [vmem:[#allocation11 + $0x20] sm:$0xff]
    %v925 = vld [vmem:[#allocation11 + $0x28] sm:$0xff]
    %v926 = vld [vmem:[#allocation11 + $0x30] sm:$0xff]
    %v927 = vld [vmem:[#allocation11 + $0x38] sm:$0xff]
    %v928 = vld [vmem:[#allocation11 + $0x40] sm:$0xff]
    %v929 = vld [vmem:[#allocation11 + $0x48] sm:$0xff]
    %v930 = vld [vmem:[#allocation11 + $0x50] sm:$0xff]
    %v931 = vld [vmem:[#allocation11 + $0x58] sm:$0xff]
    %v932 = vld [vmem:[#allocation11 + $0x60] sm:$0xff]
    %v933 = vld [vmem:[#allocation11 + $0x68] sm:$0xff]
    %v934 = vld [vmem:[#allocation11 + $0x70] sm:$0xff]
    %v935 = vld [vmem:[#allocation11 + $0x78] sm:$0xff]
    %952 = vrot.lane.b32.xlu0 %v920, 96
    %v953 = vpop.permute.xlu0 %952
    %954 = vrot.lane.b32.xlu0 %v921, 96
    %v955 = vpop.permute.xlu0 %954
    %956 = vrot.lane.b32.xlu0 %v922, 96
    %v957 = vpop.permute.xlu0 %956
    %958 = vrot.lane.b32.xlu0 %v923, 96
    %v959 = vpop.permute.xlu0 %958
    %960 = vrot.lane.b32.xlu0 %v924, 96
    %v961 = vpop.permute.xlu0 %960
    %962 = vrot.lane.b32.xlu0 %v925, 96
    %v963 = vpop.permute.xlu0 %962
    %964 = vrot.lane.b32.xlu0 %v926, 96
    %v965 = vpop.permute.xlu0 %964
    %966 = vrot.lane.b32.xlu0 %v927, 96
    %v967 = vpop.permute.xlu0 %966
    %968 = vrot.lane.b32.xlu0 %v928, 96
    %v969 = vpop.permute.xlu0 %968
    %970 = vrot.lane.b32.xlu0 %v929, 96
    %v971 = vpop.permute.xlu0 %970
    %972 = vrot.lane.b32.xlu0 %v930, 96
    %v973 = vpop.permute.xlu0 %972
    %974 = vrot.lane.b32.xlu0 %v931, 96
    %v975 = vpop.permute.xlu0 %974
    %976 = vrot.lane.b32.xlu0 %v932, 96
    %v977 = vpop.permute.xlu0 %976
    %978 = vrot.lane.b32.xlu0 %v933, 96
    %v979 = vpop.permute.xlu0 %978
    %980 = vrot.lane.b32.xlu0 %v934, 96
    %v981 = vpop.permute.xlu0 %980
    %982 = vrot.lane.b32.xlu0 %v935, 96
    %v983 = vpop.permute.xlu0 %982
    %1000 = vmatprep.subr.mxu0 0.0
    %1001 = vmatpush1.msra.mxu0 %v953
    %1002 = vmatprep.subr.mxu0 0.0
    %1003 = vmatpush1.msra.mxu0 %v955
    %1004 = vmatprep.subr.mxu0 0.0
    %1005 = vmatpush1.msra.mxu0 %v957
    %1006 = vmatprep.subr.mxu0 0.0
    %1007 = vmatpush1.msra.mxu0 %v959
    %1008 = vmatprep.subr.mxu0 0.0
    %1009 = vmatpush1.msra.mxu0 %v961
    %1010 = vmatprep.subr.mxu0 0.0
    %1011 = vmatpush1.msra.mxu0 %v963
    %1012 = vmatprep.subr.mxu0 0.0
    %1013 = vmatpush1.msra.mxu0 %v965
    %1014 = vmatprep.subr.mxu0 0.0
    %1015 = vmatpush1.msra.mxu0 %v967
    %1016 = vmatprep.subr.mxu0 0.0
    %1017 = vmatpush1.msra.mxu0 %v969
    %1018 = vmatprep.subr.mxu0 0.0
    %1019 = vmatpush1.msra.mxu0 %v971
    %1020 = vmatprep.subr.mxu0 0.0
    %1021 = vmatpush1.msra.mxu0 %v973
    %1022 = vmatprep.subr.mxu0 0.0
    %1023 = vmatpush1.msra.mxu0 %v975
    %1024 = vmatprep.subr.mxu0 0.0
    %1025 = vmatpush1.msra.mxu0 %v977
    %1026 = vmatprep.subr.mxu0 0.0
    %1027 = vmatpush1.msra.mxu0 %v979
    %1028 = vmatprep.subr.mxu0 0.0
    %1029 = vmatpush1.msra.mxu0 %v981
    %1030 = vmatprep.subr.mxu0 0.0
    %1031 = vmatpush1.msra.mxu0 %v983
    %1032 = vmatprep.subr.mxu0 0.0
    %1033 = vmatpush1.msra.mxu0 0.0
    %1034 = vmatprep.subr.mxu0 0.0
    %1035 = vmatpush1.msra.mxu0 0.0
    %1036 = vmatprep.subr.mxu0 0.0
    %1037 = vmatpush1.msra.mxu0 0.0
    %1038 = vmatprep.subr.mxu0 0.0
    %1039 = vmatpush1.msra.mxu0 0.0
    %1040 = vmatprep.subr.mxu0 0.0
    %1041 = vmatpush1.msra.mxu0 0.0
    %1042 = vmatprep.subr.mxu0 0.0
    %1043 = vmatpush1.msra.mxu0 0.0
    %1044 = vmatprep.subr.mxu0 0.0
    %1045 = vmatpush1.msra.mxu0 0.0
    %1046 = vmatprep.subr.mxu0 0.0
    %1047 = vmatpush1.msra.mxu0 0.0
    %1048 = vmatprep.subr.mxu0 0.0
    %1049 = vmatpush1.msra.mxu0 0.0
    %1050 = vmatprep.subr.mxu0 0.0
    %1051 = vmatpush1.msra.mxu0 0.0
    %1052 = vmatprep.subr.mxu0 0.0
    %1053 = vmatpush1.msra.mxu0 0.0
    %1054 = vmatprep.subr.mxu0 0.0
    %1055 = vmatpush1.msra.mxu0 0.0
    %1056 = vmatprep.subr.mxu0 0.0
    %1057 = vmatpush1.msra.mxu0 0.0
    %1058 = vmatprep.subr.mxu0 0.0
    %1059 = vmatpush1.msra.mxu0 0.0
    %1060 = vmatprep.subr.mxu0 0.0
    %1061 = vmatpush1.msra.mxu0 0.0
    %1062 = vmatprep.subr.mxu0 0.0
    %1063 = vmatpush1.msra.mxu0 0.0
    %1064 = vmatprep.mubr.f32.mxu0 0.0
    %1065 = vmatmul.mubr.f32.gmra.mrb[0].mxu0 %v257
    %v1066 = vpop.f32.mrb[0].mxu0
    %v1067 = vadd.f32 0.0, %v1066
    %v1068 = vpop.f32.mrb[0].mxu0
    %1069 = vmatprep.mubr.f32.mxu0 0.0
    %1070 = vmatmul.mubr.f32.gmra.mrb[0].mxu0 %v262
    %v1071 = vpop.f32.mrb[0].mxu0
    %v1072 = vadd.f32 0.0, %v1071
    %v1073 = vpop.f32.mrb[0].mxu0
    %1074 = vmatprep.mubr.f32.mxu0 0.0
    %1075 = vmatmul.mubr.f32.gmra.mrb[0].mxu0 %v267
    %v1076 = vpop.f32.mrb[0].mxu0
    %v1077 = vadd.f32 0.0, %v1076
    %v1078 = vpop.f32.mrb[0].mxu0
    %1079 = vmatprep.mubr.f32.mxu0 0.0
    %1080 = vmatmul.mubr.f32.gmra.mrb[0].mxu0 %v272
    %v1081 = vpop.f32.mrb[0].mxu0
    %v1082 = vadd.f32 0.0, %v1081
    %v1083 = vpop.f32.mrb[0].mxu0
    %1084 = vmatprep.mubr.f32.mxu0 0.0
    %1085 = vmatmul.mubr.f32.gmra.mrb[0].mxu0 %v277
    %v1086 = vpop.f32.mrb[0].mxu0
    %v1087 = vadd.f32 0.0, %v1086
    %v1088 = vpop.f32.mrb[0].mxu0
    %1089 = vmatprep.mubr.f32.mxu0 0.0
    %1090 = vmatmul.mubr.f32.gmra.mrb[0].mxu0 %v282
    %v1091 = vpop.f32.mrb[0].mxu0
    %v1092 = vadd.f32 0.0, %v1091
    %v1093 = vpop.f32.mrb[0].mxu0
    %1094 = vmatprep.mubr.f32.mxu0 0.0
    %1095 = vmatmul.mubr.f32.gmra.mrb[0].mxu0 %v287
    %v1096 = vpop.f32.mrb[0].mxu0
    %v1097 = vadd.f32 0.0, %v1096
    %v1098 = vpop.f32.mrb[0].mxu0
    %1099 = vmatprep.mubr.f32.mxu0 0.0
    %1100 = vmatmul.mubr.f32.gmra.mrb[0].mxu0 %v292
    %v1101 = vpop.f32.mrb[0].mxu0
    %v1102 = vadd.f32 0.0, %v1101
    %v1103 = vpop.f32.mrb[0].mxu0
    %1104 = vmatprep.mubr.f32.mxu0 0.0
    %1105 = vmatmul.mubr.f32.gmra.mrb[0].mxu0 %v297
    %v1106 = vpop.f32.mrb[0].mxu0
    %v1107 = vadd.f32 0.0, %v1106
    %v1108 = vpop.f32.mrb[0].mxu0
    %1109 = vmatprep.mubr.f32.mxu0 0.0
    %1110 = vmatmul.mubr.f32.gmra.mrb[0].mxu0 %v302
    %v1111 = vpop.f32.mrb[0].mxu0
    %v1112 = vadd.f32 0.0, %v1111
    %v1113 = vpop.f32.mrb[0].mxu0
    %1114 = vmatprep.mubr.f32.mxu0 0.0
    %1115 = vmatmul.mubr.f32.gmra.mrb[0].mxu0 %v307
    %v1116 = vpop.f32.mrb[0].mxu0
    %v1117 = vadd.f32 0.0, %v1116
    %v1118 = vpop.f32.mrb[0].mxu0
    %1119 = vmatprep.mubr.f32.mxu0 0.0
    %1120 = vmatmul.mubr.f32.gmra.mrb[0].mxu0 %v312
    %v1121 = vpop.f32.mrb[0].mxu0
    %v1122 = vadd.f32 0.0, %v1121
    %v1123 = vpop.f32.mrb[0].mxu0
    %1124 = vmatprep.mubr.f32.mxu0 0.0
    %1125 = vmatmul.mubr.f32.gmra.mrb[0].mxu0 %v317
    %v1126 = vpop.f32.mrb[0].mxu0
    %v1127 = vadd.f32 0.0, %v1126
    %v1128 = vpop.f32.mrb[0].mxu0
    %1129 = vmatprep.mubr.f32.mxu0 0.0
    %1130 = vmatmul.mubr.f32.gmra.mrb[0].mxu0 %v322
    %v1131 = vpop.f32.mrb[0].mxu0
    %v1132 = vadd.f32 0.0, %v1131
    %v1133 = vpop.f32.mrb[0].mxu0
    %1134 = vmatprep.mubr.f32.mxu0 0.0
    %1135 = vmatmul.mubr.f32.gmra.mrb[0].mxu0 %v327
    %v1136 = vpop.f32.mrb[0].mxu0
    %v1137 = vadd.f32 0.0, %v1136
    %v1138 = vpop.f32.mrb[0].mxu0
    %1139 = vmatprep.mubr.f32.mxu0 0.0
    %1140 = vmatmul.mubr.f32.gmra.mrb[0].mxu0 %v332
    %v1141 = vpop.f32.mrb[0].mxu0
    %v1142 = vadd.f32 0.0, %v1141
    %v1143 = vpop.f32.mrb[0].mxu0
    %1144 = vdwg.mxu0
    %1145 = vmatprep.subr.mxu0 0.0
    %1146 = vmatpush1.msra.mxu0 %v916
    %1147 = vmatprep.subr.mxu0 0.0
    %1148 = vmatpush1.msra.mxu0 %v917
    %1149 = vmatprep.subr.mxu0 0.0
    %1150 = vmatpush1.msra.mxu0 %v918
    %1151 = vmatprep.subr.mxu0 0.0
    %1152 = vmatpush1.msra.mxu0 %v919
    %1153 = vmatprep.subr.mxu0 0.0
    %1154 = vmatpush1.msra.mxu0 0.0
    %1155 = vmatprep.subr.mxu0 0.0
    %1156 = vmatpush1.msra.mxu0 0.0
    %1157 = vmatprep.subr.mxu0 0.0
    %1158 = vmatpush1.msra.mxu0 0.0
    %1159 = vmatprep.subr.mxu0 0.0
    %1160 = vmatpush1.msra.mxu0 0.0
    %1161 = vmatprep.subr.mxu0 0.0
    %1162 = vmatpush1.msra.mxu0 0.0
    %1163 = vmatprep.subr.mxu0 0.0
    %1164 = vmatpush1.msra.mxu0 0.0
    %1165 = vmatprep.subr.mxu0 0.0
    %1166 = vmatpush1.msra.mxu0 0.0
    %1167 = vmatprep.subr.mxu0 0.0
    %1168 = vmatpush1.msra.mxu0 0.0
    %1169 = vmatprep.subr.mxu0 0.0
    %1170 = vmatpush1.msra.mxu0 0.0
    %1171 = vmatprep.subr.mxu0 0.0
    %1172 = vmatpush1.msra.mxu0 0.0
    %1173 = vmatprep.subr.mxu0 0.0
    %1174 = vmatpush1.msra.mxu0 0.0
    %1175 = vmatprep.subr.mxu0 0.0
    %1176 = vmatpush1.msra.mxu0 0.0
    %1177 = vmatprep.subr.mxu0 0.0
    %1178 = vmatpush1.msra.mxu0 0.0
    %1179 = vmatprep.subr.mxu0 0.0
    %1180 = vmatpush1.msra.mxu0 0.0
    %1181 = vmatprep.subr.mxu0 0.0
    %1182 = vmatpush1.msra.mxu0 0.0
    %1183 = vmatprep.subr.mxu0 0.0
    %1184 = vmatpush1.msra.mxu0 0.0
    %1185 = vmatprep.subr.mxu0 0.0
    %1186 = vmatpush1.msra.mxu0 0.0
    %1187 = vmatprep.subr.mxu0 0.0
    %1188 = vmatpush1.msra.mxu0 0.0
    %1189 = vmatprep.subr.mxu0 0.0
    %1190 = vmatpush1.msra.mxu0 0.0
    %1191 = vmatprep.subr.mxu0 0.0
    %1192 = vmatpush1.msra.mxu0 0.0
    %1193 = vmatprep.subr.mxu0 0.0
    %1194 = vmatpush1.msra.mxu0 0.0
    %1195 = vmatprep.subr.mxu0 0.0
    %1196 = vmatpush1.msra.mxu0 0.0
    %1197 = vmatprep.subr.mxu0 0.0
    %1198 = vmatpush1.msra.mxu0 0.0
    %1199 = vmatprep.subr.mxu0 0.0
    %1200 = vmatpush1.msra.mxu0 0.0
    %1201 = vmatprep.subr.mxu0 0.0
    %1202 = vmatpush1.msra.mxu0 0.0
    %1203 = vmatprep.subr.mxu0 0.0
    %1204 = vmatpush1.msra.mxu0 0.0
    %1205 = vmatprep.subr.mxu0 0.0
    %1206 = vmatpush1.msra.mxu0 0.0
    %1207 = vmatprep.subr.mxu0 0.0
    %1208 = vmatpush1.msra.mxu0 0.0
    %1209 = vmatprep.mubr.f32.mxu0 0.0
    %1210 = vmatmul.mubr.f32.gmra.mrb[0].mxu0 %v143
    %v1211 = vpop.f32.mrb[0].mxu0
    %v1212 = vadd.f32 %v1067, %v1211
    %v1213 = vpop.f32.mrb[0].mxu0
    %1214 = vmatprep.mubr.f32.mxu0 0.0
    %1215 = vmatmul.mubr.f32.gmra.mrb[0].mxu0 %v146
    %v1216 = vpop.f32.mrb[0].mxu0
    %v1217 = vadd.f32 %v1072, %v1216
    %v1218 = vpop.f32.mrb[0].mxu0
    %1219 = vmatprep.mubr.f32.mxu0 0.0
    %1220 = vmatmul.mubr.f32.gmra.mrb[0].mxu0 %v149
    %v1221 = vpop.f32.mrb[0].mxu0
    %v1222 = vadd.f32 %v1077, %v1221
    %v1223 = vpop.f32.mrb[0].mxu0
    %1224 = vmatprep.mubr.f32.mxu0 0.0
    %1225 = vmatmul.mubr.f32.gmra.mrb[0].mxu0 %v152
    %v1226 = vpop.f32.mrb[0].mxu0
    %v1227 = vadd.f32 %v1082, %v1226
    %v1228 = vpop.f32.mrb[0].mxu0
    %1229 = vmatprep.mubr.f32.mxu0 0.0
    %1230 = vmatmul.mubr.f32.gmra.mrb[0].mxu0 %v155
    %v1231 = vpop.f32.mrb[0].mxu0
    %v1232 = vadd.f32 %v1087, %v1231
    %v1233 = vpop.f32.mrb[0].mxu0
    %1234 = vmatprep.mubr.f32.mxu0 0.0
    %1235 = vmatmul.mubr.f32.gmra.mrb[0].mxu0 %v158
    %v1236 = vpop.f32.mrb[0].mxu0
    %v1237 = vadd.f32 %v1092, %v1236
    %v1238 = vpop.f32.mrb[0].mxu0
    %1239 = vmatprep.mubr.f32.mxu0 0.0
    %1240 = vmatmul.mubr.f32.gmra.mrb[0].mxu0 %v161
    %v1241 = vpop.f32.mrb[0].mxu0
    %v1242 = vadd.f32 %v1097, %v1241
    %v1243 = vpop.f32.mrb[0].mxu0
    %1244 = vmatprep.mubr.f32.mxu0 0.0
    %1245 = vmatmul.mubr.f32.gmra.mrb[0].mxu0 %v164
    %v1246 = vpop.f32.mrb[0].mxu0
    %v1247 = vadd.f32 %v1102, %v1246
    %v1248 = vpop.f32.mrb[0].mxu0
    %1249 = vmatprep.mubr.f32.mxu0 0.0
    %1250 = vmatmul.mubr.f32.gmra.mrb[0].mxu0 %v167
    %v1251 = vpop.f32.mrb[0].mxu0
    %v1252 = vadd.f32 %v1107, %v1251
    %v1253 = vpop.f32.mrb[0].mxu0
    %1254 = vmatprep.mubr.f32.mxu0 0.0
    %1255 = vmatmul.mubr.f32.gmra.mrb[0].mxu0 %v170
    %v1256 = vpop.f32.mrb[0].mxu0
    %v1257 = vadd.f32 %v1112, %v1256
    %v1258 = vpop.f32.mrb[0].mxu0
    %1259 = vmatprep.mubr.f32.mxu0 0.0
    %1260 = vmatmul.mubr.f32.gmra.mrb[0].mxu0 %v173
    %v1261 = vpop.f32.mrb[0].mxu0
    %v1262 = vadd.f32 %v1117, %v1261
    %v1263 = vpop.f32.mrb[0].mxu0
    %1264 = vmatprep.mubr.f32.mxu0 0.0
    %1265 = vmatmul.mubr.f32.gmra.mrb[0].mxu0 %v176
    %v1266 = vpop.f32.mrb[0].mxu0
    %v1267 = vadd.f32 %v1122, %v1266
    %v1268 = vpop.f32.mrb[0].mxu0
    %1269 = vmatprep.mubr.f32.mxu0 0.0
    %1270 = vmatmul.mubr.f32.gmra.mrb[0].mxu0 %v179
    %v1271 = vpop.f32.mrb[0].mxu0
    %v1272 = vadd.f32 %v1127, %v1271
    %v1273 = vpop.f32.mrb[0].mxu0
    %1274 = vmatprep.mubr.f32.mxu0 0.0
    %1275 = vmatmul.mubr.f32.gmra.mrb[0].mxu0 %v182
    %v1276 = vpop.f32.mrb[0].mxu0
    %v1277 = vadd.f32 %v1132, %v1276
    %v1278 = vpop.f32.mrb[0].mxu0
    %1279 = vmatprep.mubr.f32.mxu0 0.0
    %1280 = vmatmul.mubr.f32.gmra.mrb[0].mxu0 %v185
    %v1281 = vpop.f32.mrb[0].mxu0
    %v1282 = vadd.f32 %v1137, %v1281
    %v1283 = vpop.f32.mrb[0].mxu0
    %1284 = vmatprep.mubr.f32.mxu0 0.0
    %1285 = vmatmul.mubr.f32.gmra.mrb[0].mxu0 %v188
    %v1286 = vpop.f32.mrb[0].mxu0
    %v1287 = vadd.f32 %v1142, %v1286
    %v1288 = vpop.f32.mrb[0].mxu0
    %1289 = vdwg.mxu0
    %1290 = vrot.lane.b32.xlu0 %v649, 64
    %v1291 = vpop.permute.xlu0 %1290
    %v1293 = vadd.f32 %v1212, %v1291
    %v1294 = vadd.f32 %v1217, %v1291
    %v1295 = vadd.f32 %v1222, %v1291
    %v1296 = vadd.f32 %v1227, %v1291
    %v1297 = vadd.f32 %v1232, %v1291
    %v1298 = vadd.f32 %v1237, %v1291
    %v1299 = vadd.f32 %v1242, %v1291
    %v1300 = vadd.f32 %v1247, %v1291
    %v1301 = vadd.f32 %v1252, %v1291
    %v1302 = vadd.f32 %v1257, %v1291
    %v1303 = vadd.f32 %v1262, %v1291
    %v1304 = vadd.f32 %v1267, %v1291
    %v1305 = vadd.f32 %v1272, %v1291
    %v1306 = vadd.f32 %v1277, %v1291
    %v1307 = vadd.f32 %v1282, %v1291
    %v1308 = vadd.f32 %v1287, %v1291
    %1325 = vrot.lane.b32.xlu0 %v1293, 64
    %v1326 = vpop.permute.xlu0 %1325
    %1327 = vrot.lane.b32.xlu0 %v1294, 64
    %v1328 = vpop.permute.xlu0 %1327
    %1329 = vrot.lane.b32.xlu0 %v1295, 64
    %v1330 = vpop.permute.xlu0 %1329
    %1331 = vrot.lane.b32.xlu0 %v1296, 64
    %v1332 = vpop.permute.xlu0 %1331
    %1333 = vrot.lane.b32.xlu0 %v1297, 64
    %v1334 = vpop.permute.xlu0 %1333
    %1335 = vrot.lane.b32.xlu0 %v1298, 64
    %v1336 = vpop.permute.xlu0 %1335
    %1337 = vrot.lane.b32.xlu0 %v1299, 64
    %v1338 = vpop.permute.xlu0 %1337
    %1339 = vrot.lane.b32.xlu0 %v1300, 64
    %v1340 = vpop.permute.xlu0 %1339
    %1341 = vrot.lane.b32.xlu0 %v1301, 64
    %v1342 = vpop.permute.xlu0 %1341
    %1343 = vrot.lane.b32.xlu0 %v1302, 64
    %v1344 = vpop.permute.xlu0 %1343
    %1345 = vrot.lane.b32.xlu0 %v1303, 64
    %v1346 = vpop.permute.xlu0 %1345
    %1347 = vrot.lane.b32.xlu0 %v1304, 64
    %v1348 = vpop.permute.xlu0 %1347
    %1349 = vrot.lane.b32.xlu0 %v1305, 64
    %v1350 = vpop.permute.xlu0 %1349
    %1351 = vrot.lane.b32.xlu0 %v1306, 64
    %v1352 = vpop.permute.xlu0 %1351
    %1353 = vrot.lane.b32.xlu0 %v1307, 64
    %v1354 = vpop.permute.xlu0 %1353
    %1355 = vrot.lane.b32.xlu0 %v1308, 64
    %v1356 = vpop.permute.xlu0 %1355
    %vm1373 = vcmask 785920
    %1374 = vst.msk [vmem:[#allocation14] sm:$0xff] %vm1373, %v1326
    %1375 = vst.msk [vmem:[#allocation14 + $0x8] sm:$0xff] %vm1373, %v1328
    %1376 = vst.msk [vmem:[#allocation14 + $0x10] sm:$0xff] %vm1373, %v1330
    %1377 = vst.msk [vmem:[#allocation14 + $0x18] sm:$0xff] %vm1373, %v1332
    %1378 = vst.msk [vmem:[#allocation14 + $0x20] sm:$0xff] %vm1373, %v1334
    %1379 = vst.msk [vmem:[#allocation14 + $0x28] sm:$0xff] %vm1373, %v1336
    %1380 = vst.msk [vmem:[#allocation14 + $0x30] sm:$0xff] %vm1373, %v1338
    %1381 = vst.msk [vmem:[#allocation14 + $0x38] sm:$0xff] %vm1373, %v1340
    %1382 = vst.msk [vmem:[#allocation14 + $0x40] sm:$0xff] %vm1373, %v1342
    %1383 = vst.msk [vmem:[#allocation14 + $0x48] sm:$0xff] %vm1373, %v1344
    %1384 = vst.msk [vmem:[#allocation14 + $0x50] sm:$0xff] %vm1373, %v1346
    %1385 = vst.msk [vmem:[#allocation14 + $0x58] sm:$0xff] %vm1373, %v1348
    %1386 = vst.msk [vmem:[#allocation14 + $0x60] sm:$0xff] %vm1373, %v1350
    %1387 = vst.msk [vmem:[#allocation14 + $0x68] sm:$0xff] %vm1373, %v1352
    %1388 = vst.msk [vmem:[#allocation14 + $0x70] sm:$0xff] %vm1373, %v1354
    %1389 = vst.msk [vmem:[#allocation14 + $0x78] sm:$0xff] %vm1373, %v1356
    // Predicated region
    $region58: #{tpu_custom_call.1} parent=1 // pred_check
      _
    $region59: #{tpu_custom_call.1} parent=1 // pred_check_branch
      %1391 = sbr.rel (0) target = $region61
    $region60: #{tpu_custom_call.1} parent=1 // pred_region
      %s1393 = ssub.s32 2048, 2048
      %1394 = vsyncadd [#allocation4], %s1393
      %s1395 = sshll.u32 [#allocation14], 4
      %s1396 = int_to_ptr.vmem [resolvable:$true] %s1395
      %1401 = dma.vmem_to_hbm [thread:$0]  %s1396, 2048, %s7, [#allocation4], 128, 128, 8
    $region61: #{tpu_custom_call.1} parent=1 // pred_fallthru
      _
    // Predicated region
    $region62: #{tpu_custom_call.1} parent=1 // pred_check
      _
    $region63: #{tpu_custom_call.1} parent=1 // pred_check_branch
      %1403 = sbr.rel (0) target = $region65
    $region64: #{tpu_custom_call.1} parent=1 // pred_region
      %1404 = dma.done [#allocation4], 2048
    $region65: #{tpu_custom_call.1} parent=1 // pred_fallthru
      _
    %1405 = vsyncpa [#allocation3], 1
    %1406 = vsyncpa [#allocation6], 1
    %1407 = vsyncpa [#allocation9], 1
    %1408 = vsyncpa [#allocation12], 1
    %1409 = vsyncpa [#allocation4], 1

</llo_original>
